<compile_context>
chip_gen: v7x
topology: tpu7x:2x2x1
jax: 0.10.0
libtpu: 0.0.40
codegen_flags: <defaults>
</compile_context>

<pallas_src>
import functools

import numpy as np
import jax
import jax.numpy as jnp
from jax.experimental import pallas as pl
from jax.experimental.pallas import tpu as pltpu

# ----------------------------- constants -----------------------------------
OUT_HW = 224                      # CLIP input resolution
IMAGENET_MEAN = np.array([0.485, 0.456, 0.406], dtype=np.float32)
IMAGENET_STD = np.array([0.229, 0.224, 0.225], dtype=np.float32)
_MIB = 1024 * 1024


def _vmem_capacity_bytes() -> int:
    """Per-core VMEM capacity; falls back to the v7x-safe 64 MiB."""
    try:
        info = pltpu.get_tpu_info()
        cap = getattr(info, "vmem_capacity_bytes", None)
        if cap:
            return int(cap)
    except Exception:
        pass
    return 64 * _MIB


# -------------------- bilinear resize matrices (glue) -----------------------
def bilinear_matrix(out_size: int, in_size: int) -> np.ndarray:
    """Row-stochastic (out_size, in_size) matrix reproducing torch bilinear
    (align_corners=False) interpolation along one axis."""
    scale = in_size / out_size
    dst = np.arange(out_size, dtype=np.float64)
    src = (dst + 0.5) * scale - 0.5
    src = np.clip(src, 0.0, in_size - 1)
    i0 = np.floor(src).astype(np.int64)
    i1 = np.minimum(i0 + 1, in_size - 1)
    w1 = src - i0
    w0 = 1.0 - w1
    W = np.zeros((out_size, in_size), dtype=np.float64)
    W[np.arange(out_size), i0] += w0
    W[np.arange(out_size), i1] += w1
    return W.astype(np.float32)


# ------------------------------ kernels -------------------------------------
def preprocess_kernel(x_ref, wwt_ref, wh_ref, a_ref, b_ref, o_ref, *, H):
    """Bilinear resize + folded affine normalize, bf16 output.

    x_ref:  (C*H, W) one image, channels stacked along rows.
    wwt_ref:(W, 224)   W-axis interpolation (transposed).
    wh_ref: (224, H)   H-axis interpolation.
    a_ref/b_ref: SMEM (C,) folded affine coefficients.
    o_ref:  (C, 224, 224) bf16.
    """
    C = o_ref.shape[0]
    # Stage 1, batched over channels: one (C*H, W) @ (W, 224) matmul.
    r1 = jnp.dot(x_ref[...], wwt_ref[...],
                 preferred_element_type=jnp.float32)          # (C*H, 224)
    wh = wh_ref[...]                                          # (224, H)
    for c in range(C):                                        # static (C == 3)
        rc = jnp.dot(wh, r1[c * H:(c + 1) * H, :],
                     preferred_element_type=jnp.float32)      # (224, 224)
        o_ref[c] = (rc * a_ref[c] + b_ref[c]).astype(o_ref.dtype)


def matmul_k_kernel(a_ref, b_ref, o_ref, acc_ref, *, tk, a_resident):
    """(D-tile, K-tile) grid matmul with f32 VMEM accumulator.

    Grid axis 0: output-column tiles ('parallel' -> both v7x TensorCores).
    Grid axis 1: K reduction ('arbitrary', innermost).
    If a_resident, a_ref holds the full (M, K) activation (DMA'd once) and the
    K-tile is sliced in-kernel; otherwise a_ref is the (M, tk) pipelined tile.
    """
    k = pl.program_id(1)

    @pl.when(k == 0)
    def _():
        acc_ref[...] = jnp.zeros_like(acc_ref)

    if a_resident:
        start = pl.multiple_of(k * tk, tk)
        a_blk = a_ref[:, pl.ds(start, tk)]
    else:
        a_blk = a_ref[...]
    acc_ref[...] += jnp.dot(a_blk, b_ref[...],
                            preferred_element_type=jnp.float32)

    @pl.when(k == pl.num_programs(1) - 1)
    def _():
        o_ref[...] = acc_ref[...]


def clip_head_kernel(scale_ref, img_ref, y_ref, wtxt_ref, o_ref):
    """Fused text encoder + L2-normalize + cosine-similarity, return -logits."""
    img = img_ref[...]                                                   # (N, D)
    txt = jnp.dot(y_ref[...], wtxt_ref[...],
                  preferred_element_type=jnp.float32)                    # (T, D)
    img = img * jax.lax.rsqrt(jnp.sum(img * img, axis=-1, keepdims=True) + 1e-12)
    txt = txt * jax.lax.rsqrt(jnp.sum(txt * txt, axis=-1, keepdims=True) + 1e-12)
    sim = jax.lax.dot_general(img, txt, (((1,), (1,)), ((), ())),
                              preferred_element_type=jnp.float32)        # (N, T)
    o_ref[...] = -(scale_ref[0] * sim)


# ------------------------------ wrappers -------------------------------------
def preprocess(x, wh, wwt, a, b):
    N, C, H, W = x.shape
    out_dtype = jnp.bfloat16
    # Free, contiguous reshape: stack channels along rows for the batched
    # W-stage matmul inside the kernel.
    x2 = x.reshape(N, C * H, W)
    # Size the scoped VMEM limit from the actual tile footprint so large
    # source images still compile (double-buffered in/out + weights + slack).
    in_bytes = C * H * W * jnp.dtype(x.dtype).itemsize
    out_bytes = C * OUT_HW * OUT_HW * jnp.dtype(out_dtype).itemsize
    w_bytes = (OUT_HW * H + W * OUT_HW) * 4
    vmem_need = 2 * (in_bytes + out_bytes) + 2 * w_bytes + 4 * _MIB
    vmem_limit = int(min(max(vmem_need, 16 * _MIB),
                         _vmem_capacity_bytes() * 3 // 4))
    kernel = functools.partial(preprocess_kernel, H=H)
    return pl.pallas_call(
        kernel,
        out_shape=jax.ShapeDtypeStruct((N, C, OUT_HW, OUT_HW), out_dtype),
        grid=(N,),
        in_specs=[
            pl.BlockSpec((pl.Squeezed(), C * H, W), lambda n: (n, 0, 0)),
            pl.BlockSpec((W, OUT_HW), lambda n: (0, 0)),
            pl.BlockSpec((OUT_HW, H), lambda n: (0, 0)),
            pl.BlockSpec(memory_space=pltpu.MemorySpace.SMEM),
            pl.BlockSpec(memory_space=pltpu.MemorySpace.SMEM),
        ],
        out_specs=pl.BlockSpec((pl.Squeezed(), C, OUT_HW, OUT_HW),
                               lambda n: (n, 0, 0, 0)),
        compiler_params=pltpu.CompilerParams(
            dimension_semantics=("parallel",),
            vmem_limit_bytes=vmem_limit),
    )(x2, wwt, wh, a, b)


def _pick_tn(D):
    """Lane-dense output tile; splits D so the 'parallel' axis has >=2 blocks
    (both v7x TensorCores) whenever D allows a 128-aligned split."""
    if D >= 512 and D % 256 == 0:
        return 256
    if D >= 256 and D % 128 == 0:
        return 128
    return D


def _pick_tk(K, tn, itemsize, *, vmem_budget, target=21504):
    """Largest K-tile <= target that divides K, prefers MXU alignment, and
    keeps the double-buffered (tk, tn) weight tile within the VMEM budget.
    Always honors the budget (falls back to smaller/unaligned divisors)."""
    cap = max(1, vmem_budget // (2 * tn * itemsize))
    t = min(target, cap, K)
    for align in (256, 128, 8, 1):
        tt = (t // align) * align
        while tt >= align:
            if K % tt == 0:
                return tt
            tt -= align
    return 1


def image_encoder(x_flat, w_img):
    """HBM-bandwidth-bound skinny matmul: (M, K) @ (K, D).

    Weight K-tiles are sized from chip VMEM (24 MiB budget on v7x, 48 MiB on
    v5e/v6e); the bf16 activation is kept fully resident in VMEM when small,
    so it is DMA'd exactly once instead of once per D-tile."""
    M, K = x_flat.shape
    D = w_img.shape[1]
    cap = _vmem_capacity_bytes()
    weight_budget = cap * 3 // 8           # 24 MiB (v7x) / 48 MiB (v5e/v6e)
    vmem_limit = cap * 3 // 4              # 48 MiB (v7x) / 96 MiB (v5e/v6e)

    tn = _pick_tn(D)
    assert D % tn == 0
    tk = _pick_tk(K, tn, jnp.dtype(w_img.dtype).itemsize,
                  vmem_budget=weight_budget)
    assert K % tk == 0

    a_resident = (M * K * jnp.dtype(x_flat.dtype).itemsize) <= cap // 8
    if a_resident:
        a_spec = pl.BlockSpec((M, K), lambda j, k: (0, 0))   # single DMA
    else:
        a_spec = pl.BlockSpec((M, tk), lambda j, k: (0, k))

    kernel = functools.partial(matmul_k_kernel, tk=tk, a_resident=a_resident)
    return pl.pallas_call(
        kernel,
        out_shape=jax.ShapeDtypeStruct((M, D), jnp.float32),
        grid_spec=pltpu.PrefetchScalarGridSpec(
            num_scalar_prefetch=0,
            grid=(D // tn, K // tk),
            in_specs=[a_spec,
                      pl.BlockSpec((tk, tn), lambda j, k: (k, j))],
            out_specs=pl.BlockSpec((M, tn), lambda j, k: (0, j)),
            scratch_shapes=[pltpu.VMEM((M, tn), jnp.float32)]),
        compiler_params=pltpu.CompilerParams(
            dimension_semantics=("parallel", "arbitrary"),
            vmem_limit_bytes=int(vmem_limit)),
    )(x_flat, w_img)


def clip_head(img_emb, y, w_txt, logit_scale):
    """Fused text-encode + normalize + negative logits_per_image."""
    N = img_emb.shape[0]
    T = y.shape[0]
    return pl.pallas_call(
        clip_head_kernel,
        out_shape=jax.ShapeDtypeStruct((N, T), jnp.float32),
        in_specs=[pl.BlockSpec(memory_space=pltpu.MemorySpace.SMEM),
                  pl.BlockSpec(memory_space=pltpu.MemorySpace.VMEM),
                  pl.BlockSpec(memory_space=pltpu.MemorySpace.VMEM),
                  pl.BlockSpec(memory_space=pltpu.MemorySpace.VMEM)],
        out_specs=pl.BlockSpec(memory_space=pltpu.MemorySpace.VMEM),
    )(logit_scale, img_emb, y, w_txt)


def clip_forward(x, y, params):
    """Mirrors Clip.forward(x, y): preprocess -> CLIP -> -logits_per_image."""
    N = x.shape[0]
    x224 = preprocess(x, params["wh"], params["wwt"],
                      params["a"], params["b"])     # (N, 3, 224, 224) bf16
    # Channel-major (C, H, W) flatten; must match w_img's K ordering.
    x_flat = x224.reshape(N, -1)
    img_emb = image_encoder(x_flat, params["w_img"])          # (N, D) f32
    return clip_head(img_emb, y, params["w_txt"], params["logit_scale"])


def init_params(key, *, in_h, in_w, txt_dim, emb_dim):
    k_img, k_txt = jax.random.split(key, 2)
    K = 3 * OUT_HW * OUT_HW
    # Folded affine: (0.5*R + 0.5 - mean)/std = R * a + b
    a = (0.5 / IMAGENET_STD).astype(np.float32)
    b = ((0.5 - IMAGENET_MEAN) / IMAGENET_STD).astype(np.float32)
    return {
        "wh": jnp.asarray(bilinear_matrix(OUT_HW, in_h)),      # (224, H)
        "wwt": jnp.asarray(bilinear_matrix(OUT_HW, in_w).T),   # (W, 224)
        "a": jnp.asarray(a),
        "b": jnp.asarray(b),
        # Synthetic stand-in weights; bf16 halves the dominant HBM stream.
        "w_img": (jax.random.normal(k_img, (K, emb_dim), jnp.float32)
                  / np.sqrt(K)).astype(jnp.bfloat16),
        "w_txt": (jax.random.normal(k_txt, (txt_dim, emb_dim), jnp.float32)
                  / np.sqrt(txt_dim)).astype(jnp.float32),
        "logit_scale": jnp.asarray([1.0 / 0.07], dtype=jnp.float32),
    }


if __name__ == "__main__":
    N, C, H, W = 2, 3, 16, 16      # CLIP takes 3-channel images
    T, DTXT, DEMB = 8, 64, 32

    key = jax.random.PRNGKey(0)
    k_x, k_y, k_p = jax.random.split(key, 3)
    x = jax.random.uniform(k_x, (N, C, H, W), jnp.float32, -1.0, 1.0)  # in [-1, 1]
    y = jax.random.normal(k_y, (T, DTXT), jnp.float32)                  # text features

    params = init_params(k_p, in_h=H, in_w=W, txt_dim=DTXT, emb_dim=DEMB)

    out = clip_forward(x, y, params)          # (N, T) = -logits_per_image
    out = jax.block_until_ready(out)
    assert out.shape == (N, T)
    assert bool(jnp.all(jnp.isfinite(out)))
    print("KERNEL_OK")
</pallas_src>

<mosaic_0001>
module attributes {stable_mosaic.version = 11 : i64} {
  func.func @preprocess_kernel(%arg0: i32, %arg1: memref<1x48x16xf32, #tpu.memory_space<vmem>>, %arg2: memref<16x224xf32, #tpu.memory_space<vmem>>, %arg3: memref<224x16xf32, #tpu.memory_space<vmem>>, %arg4: memref<3xf32, #tpu.memory_space<smem>>, %arg5: memref<3xf32, #tpu.memory_space<smem>>, %arg6: memref<1x3x224x224xbf16, #tpu.memory_space<vmem>>) attributes {dimension_semantics = [#tpu.dimension_semantics<parallel>], iteration_bounds = array<i64: 2>, scalar_prefetch = 0 : i64, scratch_operands = 0 : i64, tpu.core_type = #tpu.core_type<tc>, window_params = [{transform_indices = @transform_0, window_bounds = array<i64: 1, 48, 16>}, {pipeline_mode = #tpu.pipeline_mode<synchronous>, transform_indices = @transform_1, window_bounds = array<i64: 16, 224>}, {pipeline_mode = #tpu.pipeline_mode<synchronous>, transform_indices = @transform_2, window_bounds = array<i64: 224, 16>}, {transform_indices = @transform_3, window_bounds = array<i64: 3>}, {transform_indices = @transform_4, window_bounds = array<i64: 3>}, {transform_indices = @transform_5, window_bounds = array<i64: 1, 3, 224, 224>}]} {
    %c0 = arith.constant 0 : index
    %c0_0 = arith.constant 0 : index
    %c0_1 = arith.constant 0 : index
    %0 = vector.load %arg1[%c0, %c0_0, %c0_1] : memref<1x48x16xf32, #tpu.memory_space<vmem>>, vector<1x48x16xf32>
    %1 = vector.shape_cast %0 : vector<1x48x16xf32> to vector<48x16xf32>
    %c0_2 = arith.constant 0 : index
    %c0_3 = arith.constant 0 : index
    %2 = vector.load %arg2[%c0_2, %c0_3] : memref<16x224xf32, #tpu.memory_space<vmem>>, vector<16x224xf32>
    %cst = arith.constant dense<0.000000e+00> : vector<48x224xf32>
    %3 = tpu.matmul %1, %2, %cst {dimension_numbers = #tpu.dot_dimension_numbers<[1], [0], [0], [1], [0, 0, 1, 1], [], []>} : vector<48x16xf32>, vector<16x224xf32>, vector<48x224xf32> -> vector<48x224xf32>
    %c0_4 = arith.constant 0 : index
    %c0_5 = arith.constant 0 : index
    %4 = vector.load %arg3[%c0_4, %c0_5] : memref<224x16xf32, #tpu.memory_space<vmem>>, vector<224x16xf32>
    %5 = vector.extract_strided_slice %3 {offsets = [0, 0], sizes = [16, 224], strides = [1, 1]} : vector<48x224xf32> to vector<16x224xf32>
    %cst_6 = arith.constant dense<0.000000e+00> : vector<224x224xf32>
    %6 = tpu.matmul %4, %5, %cst_6 {dimension_numbers = #tpu.dot_dimension_numbers<[1], [0], [0], [1], [0, 0, 1, 1], [], []>} : vector<224x16xf32>, vector<16x224xf32>, vector<224x224xf32> -> vector<224x224xf32>
    %c0_7 = arith.constant 0 : index
    %7 = memref.load %arg4[%c0_7] : memref<3xf32, #tpu.memory_space<smem>>
    %8 = vector.broadcast %7 : f32 to vector<224x224xf32>
    %9 = arith.mulf %6, %8 : vector<224x224xf32>
    %c0_8 = arith.constant 0 : index
    %10 = memref.load %arg5[%c0_8] : memref<3xf32, #tpu.memory_space<smem>>
    %11 = vector.broadcast %10 : f32 to vector<224x224xf32>
    %12 = arith.addf %9, %11 : vector<224x224xf32>
    %13 = arith.truncf %12 : vector<224x224xf32> to vector<224x224xbf16>
    %c0_9 = arith.constant 0 : index
    %c0_10 = arith.constant 0 : index
    %c0_11 = arith.constant 0 : index
    %c0_12 = arith.constant 0 : index
    %14 = vector.load %arg6[%c0_9, %c0_10, %c0_11, %c0_12] : memref<1x3x224x224xbf16, #tpu.memory_space<vmem>>, vector<1x1x224x224xbf16>
    %15 = vector.shape_cast %14 : vector<1x1x224x224xbf16> to vector<224x224xbf16>
    %16 = vector.shape_cast %13 : vector<224x224xbf16> to vector<1x1x224x224xbf16>
    tpu.vector_store %arg6[%c0_9, %c0_10, %c0_11, %c0_12], %16 {strides = array<i32>} : memref<1x3x224x224xbf16, #tpu.memory_space<vmem>>, vector<1x1x224x224xbf16>,
    %17 = vector.extract_strided_slice %3 {offsets = [16, 0], sizes = [16, 224], strides = [1, 1]} : vector<48x224xf32> to vector<16x224xf32>
    %cst_13 = arith.constant dense<0.000000e+00> : vector<224x224xf32>
    %18 = tpu.matmul %4, %17, %cst_13 {dimension_numbers = #tpu.dot_dimension_numbers<[1], [0], [0], [1], [0, 0, 1, 1], [], []>} : vector<224x16xf32>, vector<16x224xf32>, vector<224x224xf32> -> vector<224x224xf32>
    %c1 = arith.constant 1 : index
    %19 = memref.load %arg4[%c1] : memref<3xf32, #tpu.memory_space<smem>>
    %20 = vector.broadcast %19 : f32 to vector<224x224xf32>
    %21 = arith.mulf %18, %20 : vector<224x224xf32>
    %c1_14 = arith.constant 1 : index
    %22 = memref.load %arg5[%c1_14] : memref<3xf32, #tpu.memory_space<smem>>
    %23 = vector.broadcast %22 : f32 to vector<224x224xf32>
    %24 = arith.addf %21, %23 : vector<224x224xf32>
    %25 = arith.truncf %24 : vector<224x224xf32> to vector<224x224xbf16>
    %c0_15 = arith.constant 0 : index
    %c1_16 = arith.constant 1 : index
    %c0_17 = arith.constant 0 : index
    %c0_18 = arith.constant 0 : index
    %26 = vector.load %arg6[%c0_15, %c1_16, %c0_17, %c0_18] : memref<1x3x224x224xbf16, #tpu.memory_space<vmem>>, vector<1x1x224x224xbf16>
    %27 = vector.shape_cast %26 : vector<1x1x224x224xbf16> to vector<224x224xbf16>
    %28 = vector.shape_cast %25 : vector<224x224xbf16> to vector<1x1x224x224xbf16>
    tpu.vector_store %arg6[%c0_15, %c1_16, %c0_17, %c0_18], %28 {strides = array<i32>} : memref<1x3x224x224xbf16, #tpu.memory_space<vmem>>, vector<1x1x224x224xbf16>,
    %29 = vector.extract_strided_slice %3 {offsets = [32, 0], sizes = [16, 224], strides = [1, 1]} : vector<48x224xf32> to vector<16x224xf32>
    %cst_19 = arith.constant dense<0.000000e+00> : vector<224x224xf32>
    %30 = tpu.matmul %4, %29, %cst_19 {dimension_numbers = #tpu.dot_dimension_numbers<[1], [0], [0], [1], [0, 0, 1, 1], [], []>} : vector<224x16xf32>, vector<16x224xf32>, vector<224x224xf32> -> vector<224x224xf32>
    %c2 = arith.constant 2 : index
    %31 = memref.load %arg4[%c2] : memref<3xf32, #tpu.memory_space<smem>>
    %32 = vector.broadcast %31 : f32 to vector<224x224xf32>
    %33 = arith.mulf %30, %32 : vector<224x224xf32>
    %c2_20 = arith.constant 2 : index
    %34 = memref.load %arg5[%c2_20] : memref<3xf32, #tpu.memory_space<smem>>
    %35 = vector.broadcast %34 : f32 to vector<224x224xf32>
    %36 = arith.addf %33, %35 : vector<224x224xf32>
    %37 = arith.truncf %36 : vector<224x224xf32> to vector<224x224xbf16>
    %c0_21 = arith.constant 0 : index
    %c2_22 = arith.constant 2 : index
    %c0_23 = arith.constant 0 : index
    %c0_24 = arith.constant 0 : index
    %38 = vector.load %arg6[%c0_21, %c2_22, %c0_23, %c0_24] : memref<1x3x224x224xbf16, #tpu.memory_space<vmem>>, vector<1x1x224x224xbf16>
    %39 = vector.shape_cast %38 : vector<1x1x224x224xbf16> to vector<224x224xbf16>
    %40 = vector.shape_cast %37 : vector<224x224xbf16> to vector<1x1x224x224xbf16>
    tpu.vector_store %arg6[%c0_21, %c2_22, %c0_23, %c0_24], %40 {strides = array<i32>} : memref<1x3x224x224xbf16, #tpu.memory_space<vmem>>, vector<1x1x224x224xbf16>,
    return
  }
  func.func @transform_0(%arg0: i32) -> (i32, i32, i32) {
    %c0_i32 = arith.constant 0 : i32
    %c0_i32_0 = arith.constant 0 : i32
    %c0_i32_1 = arith.constant 0 : i32
    return %arg0, %c0_i32, %c0_i32_0 : i32, i32, i32
  }
  func.func @transform_1(%arg0: i32) -> (i32, i32) {
    %c0_i32 = arith.constant 0 : i32
    %c0_i32_0 = arith.constant 0 : i32
    %c0_i32_1 = arith.constant 0 : i32
    return %c0_i32, %c0_i32_0 : i32, i32
  }
  func.func @transform_2(%arg0: i32) -> (i32, i32) {
    %c0_i32 = arith.constant 0 : i32
    %c0_i32_0 = arith.constant 0 : i32
    %c0_i32_1 = arith.constant 0 : i32
    return %c0_i32, %c0_i32_0 : i32, i32
  }
  func.func @transform_3(%arg0: i32) -> i32 {
    %c0_i32 = arith.constant 0 : i32
    %c0_i32_0 = arith.constant 0 : i32
    return %c0_i32 : i32
  }
  func.func @transform_4(%arg0: i32) -> i32 {
    %c0_i32 = arith.constant 0 : i32
    %c0_i32_0 = arith.constant 0 : i32
    return %c0_i32 : i32
  }
  func.func @transform_5(%arg0: i32) -> (i32, i32, i32, i32) {
    %c0_i32 = arith.constant 0 : i32
    %c0_i32_0 = arith.constant 0 : i32
    %c0_i32_1 = arith.constant 0 : i32
    %c0_i32_2 = arith.constant 0 : i32
    return %arg0, %c0_i32, %c0_i32_0, %c0_i32_1 : i32, i32, i32, i32
  }
}

</mosaic_0001>

<llo_original>
// kernel: tpu_custom_call.1
$region0: #{tpu_custom_call.1}
  #allocation0 [shape = 'u32[]', space=smem, size = 0x4, offset = 0x4, fixed_abs, tag = 'smem constant byte address 0x4 - core index']
  #allocation1 [shape = 'u32[144,128]{1,0:T(1,128)}', space=vmem, size = 0x12000, scoped, tag = 'internal scratch']
  %s0 = inlined_call_operand.vmem [shape: f32[2,48,16], index: 0, kind: input, shape index: {}]
  %s1 = inlined_call_operand.vmem [shape: f32[16,224], index: 1, kind: input, shape index: {}]
  %s2 = inlined_call_operand.vmem [shape: f32[224,16], index: 2, kind: input, shape index: {}]
  %s3 = inlined_call_operand.vmem [shape: f32[3], index: 3, kind: input, shape index: {}]
  %s4 = inlined_call_operand.vmem [shape: f32[3], index: 4, kind: input, shape index: {}]
  %s5 = inlined_call_operand.hbm [shape: bf16[2,3,224,224], index: 5, kind: output, shape index: {}]
  %s6 = sld [smem:[#allocation0]]
  $region61: #{tpu_custom_call.1} parent=0
    _
  %s8 = ssub.s32 1, %s6
  %s9 = scalar_select 0, %s8, %s6
  $region1: #{tpu_custom_call.1} parent=0
    #allocation2 [shape = 'u8[512]{0}', space=smem, size = 0x200, scoped, tag = 'input window, operand 3, single buffered']
    #allocation3 [shape = 's32[2]{0}', space=sflag, size = 0x8, scoped, tag = 'scoped memory for tpu_custom_call.1']
    #allocation4 [shape = 's32[2]{0}', space=sflag, size = 0x8, scoped, tag = 'scoped memory for tpu_custom_call.1']
    #allocation5 [shape = 'u8[512]{0}', space=smem, size = 0x200, scoped, tag = 'input window, operand 4, single buffered']
    #allocation6 [shape = 's32[1]{0}', space=sflag, size = 0x4, scoped, tag = 'scoped memory for tpu_custom_call.1']
    #allocation7 [shape = 'u8[688128]{0}', space=vmem, size = 0xa8000, scoped, tag = 'output window, operand 0']
    %10 = vsyncpa [#allocation4], 0
    %11 = vsyncpa [#allocation6], 0
    %12 = vsyncpa [#allocation3], 0
    %s13 = scalar_lea.sflag [#allocation3], 1
    %14 = vsyncpa %s13, 0
    loop: start=0, step=1, limit=4
    $region2: #{tpu_custom_call.1} parent=1 // loop_pre_header
      _
    $region3: #{tpu_custom_call.1} parent=1 // loop_header
      %s16 = sphi 0, %s20
      %p17 = scmp.ge.s32.totalorder %s16, 4
      %s26 = sphi 0, %s28
      %s29 = sphi 0, %s26
      %s30 = sphi 0, %s29
      %s46 = sphi 0, %s30
      %s50 = sphi 0, %s50
      %s52 = sphi 0, %s50
      %s53 = sphi 0, %s52
      %s67 = sphi 0, %s53
      %s71 = sphi 0, %s71
      %s73 = sphi 0, %s71
      %s74 = sphi 0, %s73
      %s88 = sphi 0, %s74
      %s92 = sphi 0, %s92
      %s94 = sphi 0, %s92
      %s95 = sphi 0, %s94
      %s109 = sphi 0, %s95
      %s113 = sphi 0, %s113
      %s115 = sphi 0, %s113
      %s116 = sphi 0, %s115
      %s130 = sphi 0, %s116
      %s136 = sphi 0, %s138
      %s139 = sphi 0, %s136
      %s140 = sphi 0, %s139
      %s156 = sphi 0, %s140
    $region4: #{tpu_custom_call.1} parent=1 // loop_header_branch
      %19 = sbr.rel (%p17) target = $region8
    $region5: #{tpu_custom_call.1} parent=1 // loop_body
      %s21 = ssub.s32 %s16, 1
      %s22 = ssub.s32 %s16, 2
      %s23 = sadd.s32 %s16, 1
      %s24 = ssub.s32 %s16, %s23
      %p25 = scmp.eq.s32.totalorder %s24, 0
      %s27 = sadd.s32 %s26, 1
      %s28 = scalar_select %p25, %s26, %s27
      %p31 = pneg %p25
      %p32 = scmp.eq.s32.totalorder %s16, 1
      %p33 = por %p31, %p32
      %p34 = scmp.ne.s32.totalorder %s26, %s29
      %p35 = scmp.eq.s32.totalorder %s16, 0
      %p36 = por %p34, %p35
      %p37 = scmp.ne.s32.totalorder %s26, %s29
      %p38 = scmp.eq.s32.totalorder %s21, 1
      %p39 = por %p37, %p38
      %p40 = scmp.ne.s32.totalorder %s29, %s30
      %p41 = scmp.eq.s32.totalorder %s21, 0
      %p42 = por %p40, %p41
      %p43 = scmp.ne.s32.totalorder %s29, %s30
      %p44 = scmp.eq.s32.totalorder %s22, 1
      %p45 = por %p43, %p44
      %p47 = scmp.ne.s32.totalorder %s30, %s46
      %p48 = scmp.eq.s32.totalorder %s22, 0
      %p49 = por %p47, %p48
      %s51 = sadd.s32 %s50, 1
      %p54 = scmp.eq.s32.totalorder %s16, 1
      %p55 = scmp.ne.s32.totalorder %s50, %s52
      %p56 = scmp.eq.s32.totalorder %s16, 0
      %p57 = por %p55, %p56
      %p58 = scmp.ne.s32.totalorder %s50, %s52
      %p59 = scmp.eq.s32.totalorder %s21, 1
      %p60 = por %p58, %p59
      %p61 = scmp.ne.s32.totalorder %s52, %s53
      %p62 = scmp.eq.s32.totalorder %s21, 0
      %p63 = por %p61, %p62
      %p64 = scmp.ne.s32.totalorder %s52, %s53
      %p65 = scmp.eq.s32.totalorder %s22, 1
      %p66 = por %p64, %p65
      %p68 = scmp.ne.s32.totalorder %s53, %s67
      %p69 = scmp.eq.s32.totalorder %s22, 0
      %p70 = por %p68, %p69
      %s72 = sadd.s32 %s71, 1
      %p75 = scmp.eq.s32.totalorder %s16, 1
      %p76 = scmp.ne.s32.totalorder %s71, %s73
      %p77 = scmp.eq.s32.totalorder %s16, 0
      %p78 = por %p76, %p77
      %p79 = scmp.ne.s32.totalorder %s71, %s73
      %p80 = scmp.eq.s32.totalorder %s21, 1
      %p81 = por %p79, %p80
      %p82 = scmp.ne.s32.totalorder %s73, %s74
      %p83 = scmp.eq.s32.totalorder %s21, 0
      %p84 = por %p82, %p83
      %p85 = scmp.ne.s32.totalorder %s73, %s74
      %p86 = scmp.eq.s32.totalorder %s22, 1
      %p87 = por %p85, %p86
      %p89 = scmp.ne.s32.totalorder %s74, %s88
      %p90 = scmp.eq.s32.totalorder %s22, 0
      %p91 = por %p89, %p90
      %s93 = sadd.s32 %s92, 1
      %p96 = scmp.eq.s32.totalorder %s16, 1
      %p97 = scmp.ne.s32.totalorder %s92, %s94
      %p98 = scmp.eq.s32.totalorder %s16, 0
      %p99 = por %p97, %p98
      %p100 = scmp.ne.s32.totalorder %s92, %s94
      %p101 = scmp.eq.s32.totalorder %s21, 1
      %p102 = por %p100, %p101
      %p103 = scmp.ne.s32.totalorder %s94, %s95
      %p104 = scmp.eq.s32.totalorder %s21, 0
      %p105 = por %p103, %p104
      %p106 = scmp.ne.s32.totalorder %s94, %s95
      %p107 = scmp.eq.s32.totalorder %s22, 1
      %p108 = por %p106, %p107
      %p110 = scmp.ne.s32.totalorder %s95, %s109
      %p111 = scmp.eq.s32.totalorder %s22, 0
      %p112 = por %p110, %p111
      %s114 = sadd.s32 %s113, 1
      %p117 = scmp.eq.s32.totalorder %s16, 1
      %p118 = scmp.ne.s32.totalorder %s113, %s115
      %p119 = scmp.eq.s32.totalorder %s16, 0
      %p120 = por %p118, %p119
      %p121 = scmp.ne.s32.totalorder %s113, %s115
      %p122 = scmp.eq.s32.totalorder %s21, 1
      %p123 = por %p121, %p122
      %p124 = scmp.ne.s32.totalorder %s115, %s116
      %p125 = scmp.eq.s32.totalorder %s21, 0
      %p126 = por %p124, %p125
      %p127 = scmp.ne.s32.totalorder %s115, %s116
      %p128 = scmp.eq.s32.totalorder %s22, 1
      %p129 = por %p127, %p128
      %p131 = scmp.ne.s32.totalorder %s116, %s130
      %p132 = scmp.eq.s32.totalorder %s22, 0
      %p133 = por %p131, %p132
      %s134 = ssub.s32 %s16, %s23
      %p135 = scmp.eq.s32.totalorder %s134, 0
      %s137 = sadd.s32 %s136, 1
      %s138 = scalar_select %p135, %s136, %s137
      %p141 = pneg %p135
      %p142 = scmp.eq.s32.totalorder %s16, 1
      %p143 = por %p141, %p142
      %p144 = scmp.ne.s32.totalorder %s136, %s139
      %p145 = scmp.eq.s32.totalorder %s16, 0
      %p146 = por %p144, %p145
      %p147 = scmp.ne.s32.totalorder %s136, %s139
      %p148 = scmp.eq.s32.totalorder %s21, 1
      %p149 = por %p147, %p148
      %p150 = scmp.ne.s32.totalorder %s139, %s140
      %p151 = scmp.eq.s32.totalorder %s21, 0
      %p152 = por %p150, %p151
      %p153 = scmp.ne.s32.totalorder %s139, %s140
      %p154 = scmp.eq.s32.totalorder %s22, 1
      %p155 = por %p153, %p154
      %p157 = scmp.ne.s32.totalorder %s140, %s156
      %p158 = scmp.eq.s32.totalorder %s22, 0
      %p159 = por %p157, %p158
      %p160 = scmp.le.s32.totalorder 1, %s16
      %p161 = scmp.lt.s32.totalorder %s16, 3
      %p162 = pnand %p160, %p161
      %p163 = pneg %p162
      // Predicated region
      $region9: #{tpu_custom_call.1} parent=5 // pred_check
        _
      $region10: #{tpu_custom_call.1} parent=5 // pred_check_branch
        %165 = sbr.rel (%p162) target = $region12
      $region11: #{tpu_custom_call.1} parent=5 // pred_region
        %s166 = ssub.s32 %s16, 1
        // Predicated region
        $region13: #{tpu_custom_call.1} parent=11 // pred_check
          %p167 = pneg %p63
        $region14: #{tpu_custom_call.1} parent=11 // pred_check_branch
          %169 = sbr.rel (%p167) target = $region16
        $region15: #{tpu_custom_call.1} parent=11 // pred_region
          _
        $region16: #{tpu_custom_call.1} parent=11 // pred_fallthru
          _
        // Predicated region
        $region17: #{tpu_custom_call.1} parent=11 // pred_check
          %p170 = pneg %p84
        $region18: #{tpu_custom_call.1} parent=11 // pred_check_branch
          %172 = sbr.rel (%p170) target = $region20
        $region19: #{tpu_custom_call.1} parent=11 // pred_region
          _
        $region20: #{tpu_custom_call.1} parent=11 // pred_fallthru
          _
        // Predicated region
        $region21: #{tpu_custom_call.1} parent=11 // pred_check
          %p173 = pneg %p105
        $region22: #{tpu_custom_call.1} parent=11 // pred_check_branch
          %175 = sbr.rel (%p173) target = $region24
        $region23: #{tpu_custom_call.1} parent=11 // pred_region
          %s177 = ssub.s32 16, 16
          %178 = vsyncadd [#allocation4], %s177
          %s180 = sshll.u32 %s3, 4
          %s181 = int_to_ptr.vmem [resolvable:$true] %s180
          %183 = dma.vmem_to_smem %s181, 16, [#allocation2], [#allocation4]
        $region24: #{tpu_custom_call.1} parent=11 // pred_fallthru
          _
        // Predicated region
        $region25: #{tpu_custom_call.1} parent=11 // pred_check
          %p184 = pneg %p126
        $region26: #{tpu_custom_call.1} parent=11 // pred_check_branch
          %186 = sbr.rel (%p184) target = $region28
        $region27: #{tpu_custom_call.1} parent=11 // pred_region
          %s188 = ssub.s32 16, 16
          %189 = vsyncadd [#allocation6], %s188
          %s191 = sshll.u32 %s4, 4
          %s192 = int_to_ptr.vmem [resolvable:$true] %s191
          %194 = dma.vmem_to_smem %s192, 16, [#allocation5], [#allocation6]
        $region28: #{tpu_custom_call.1} parent=11 // pred_fallthru
          _
      $region12: #{tpu_custom_call.1} parent=5 // pred_fallthru
        _
      %p195 = scmp.lt.s32.totalorder %s16, 2
      // Predicated region
      $region29: #{tpu_custom_call.1} parent=5 // pred_check
        %p196 = pneg %p195
      $region30: #{tpu_custom_call.1} parent=5 // pred_check_branch
        %198 = sbr.rel (%p196) target = $region32
      $region31: #{tpu_custom_call.1} parent=5 // pred_region
        // Predicated region
        $region33: #{tpu_custom_call.1} parent=31 // pred_check
          %p199 = pneg %p36
        $region34: #{tpu_custom_call.1} parent=31 // pred_check_branch
          %201 = sbr.rel (%p199) target = $region36
        $region35: #{tpu_custom_call.1} parent=31 // pred_region
          %p202 = scmp.lt.s32.totalorder %s16, 1
          %s203 = scalar_select %p202, %s16, 1
          %s204 = smul.addr %s203, 6
          %s205 = smul.addr %s204, 8
          %s206 = scalar_lea.vmem %s0, %s205
        $region36: #{tpu_custom_call.1} parent=31 // pred_fallthru
          _
      $region32: #{tpu_custom_call.1} parent=5 // pred_fallthru
        _
      %p207 = scmp.le.s32.totalorder 1, %s16
      %p208 = scmp.lt.s32.totalorder %s16, 3
      %p209 = pnand %p207, %p208
      %p210 = pneg %p209
      // Predicated region
      $region37: #{tpu_custom_call.1} parent=5 // pred_check
        _
      $region38: #{tpu_custom_call.1} parent=5 // pred_check_branch
        %212 = sbr.rel (%p209) target = $region40
      $region39: #{tpu_custom_call.1} parent=5 // pred_region
        %s213 = ssub.s32 %s16, 1
        // Predicated region
        $region41: #{tpu_custom_call.1} parent=39 // pred_check
          %p214 = pneg %p105
        $region42: #{tpu_custom_call.1} parent=39 // pred_check_branch
          %216 = sbr.rel (%p214) target = $region44
        $region43: #{tpu_custom_call.1} parent=39 // pred_region
          %217 = dma.done [#allocation4], 16
        $region44: #{tpu_custom_call.1} parent=39 // pred_fallthru
          _
        // Predicated region
        $region45: #{tpu_custom_call.1} parent=39 // pred_check
          %p218 = pneg %p126
        $region46: #{tpu_custom_call.1} parent=39 // pred_check_branch
          %220 = sbr.rel (%p218) target = $region48
        $region47: #{tpu_custom_call.1} parent=39 // pred_region
          %221 = dma.done [#allocation6], 16
        $region48: #{tpu_custom_call.1} parent=39 // pred_fallthru
          _
        %222 = sfence
        %p223 = scmp.lt.s32.totalorder %s21, 1
        %s224 = scalar_select %p223, %s21, 1
        %s225 = smul.addr %s224, 6
        %s226 = smul.addr %s225, 8
        %s227 = scalar_lea.vmem %s0, %s226
        %p228 = pneg %p42
        %p229 = pneg %p39
        %p230 = pneg %p63
        %p231 = pneg %p60
        %p232 = pneg %p84
        %p233 = pneg %p81
        %p234 = pneg %p105
        %p235 = pneg %p102
        %p236 = pneg %p126
        %p237 = pneg %p123
        %p238 = pneg %p152
        %p239 = pneg %p149
        %s240 = sand.u32 %s139, 1
        %s241 = scalar_lea.sflag [#allocation3], %s240
        %s242 = sand.u32 %s139, 1
        %s243 = smul.addr %s242, 672
        %s244 = scalar_lea.vmem [#allocation7], %s243
        %p245 = scmp.lt.s32.totalorder %s21, 1
        %s246 = scalar_select %p245, %s21, 1
        %s247 = smul.addr %s246, 6
        %s248 = smul.addr %s247, 8
        %s249 = scalar_lea.vmem %s0, %s248
        %v250 = vld [vmem:[%s249] sm:$0xff]
        %v251 = vld [vmem:[%s249 + $0x8] sm:$0xff]
        %v252 = vld [vmem:[%s249 + $0x10] sm:$0xff]
        %v253 = vld [vmem:[%s249 + $0x18] sm:$0xff]
        %v254 = vld [vmem:[%s249 + $0x20] sm:$0xff]
        %v255 = vld [vmem:[%s249 + $0x28] sm:$0xff]
        %v256 = vld [vmem:[%s1] sm:$0xff]
        %v257 = vld [vmem:[%s1 + $0x8] sm:$0xff]
        %v258 = vld [vmem:[%s1 + $0x10] sm:$0xff]
        %v259 = vld [vmem:[%s1 + $0x18] sm:$0xff]
        %vm260 = vcmask 130048
        %v262 = vsel %vm260, %v250, 0
        %v265 = vsel %vm260, %v251, 0
        %v268 = vsel %vm260, %v252, 0
        %v271 = vsel %vm260, %v253, 0
        %v274 = vsel %vm260, %v254, 0
        %v277 = vsel %vm260, %v255, 0
        %279 = vmatprep.subr.mxu0 %v257
        %280 = vmatpush1.msra.mxu0 %v256
        %281 = vmatprep.subr.mxu0 %v259
        %282 = vmatpush1.msra.mxu0 %v258
        %283 = vmatprep.subr.mxu0 0.0
        %284 = vmatpush1.msra.mxu0 0.0
        %285 = vmatprep.subr.mxu0 0.0
        %286 = vmatpush1.msra.mxu0 0.0
        %287 = vmatprep.subr.mxu0 0.0
        %288 = vmatpush1.msra.mxu0 0.0
        %289 = vmatprep.subr.mxu0 0.0
        %290 = vmatpush1.msra.mxu0 0.0
        %291 = vmatprep.subr.mxu0 0.0
        %292 = vmatpush1.msra.mxu0 0.0
        %293 = vmatprep.subr.mxu0 0.0
        %294 = vmatpush1.msra.mxu0 0.0
        %295 = vmatprep.subr.mxu0 0.0
        %296 = vmatpush1.msra.mxu0 0.0
        %297 = vmatprep.subr.mxu0 0.0
        %298 = vmatpush1.msra.mxu0 0.0
        %299 = vmatprep.subr.mxu0 0.0
        %300 = vmatpush1.msra.mxu0 0.0
        %301 = vmatprep.subr.mxu0 0.0
        %302 = vmatpush1.msra.mxu0 0.0
        %303 = vmatprep.subr.mxu0 0.0
        %304 = vmatpush1.msra.mxu0 0.0
        %305 = vmatprep.subr.mxu0 0.0
        %306 = vmatpush1.msra.mxu0 0.0
        %307 = vmatprep.subr.mxu0 0.0
        %308 = vmatpush1.msra.mxu0 0.0
        %309 = vmatprep.subr.mxu0 0.0
        %310 = vmatpush1.msra.mxu0 0.0
        %311 = vmatprep.subr.mxu0 0.0
        %312 = vmatpush1.msra.mxu0 0.0
        %313 = vmatprep.subr.mxu0 0.0
        %314 = vmatpush1.msra.mxu0 0.0
        %315 = vmatprep.subr.mxu0 0.0
        %316 = vmatpush1.msra.mxu0 0.0
        %317 = vmatprep.subr.mxu0 0.0
        %318 = vmatpush1.msra.mxu0 0.0
        %319 = vmatprep.subr.mxu0 0.0
        %320 = vmatpush1.msra.mxu0 0.0
        %321 = vmatprep.subr.mxu0 0.0
        %322 = vmatpush1.msra.mxu0 0.0
        %323 = vmatprep.subr.mxu0 0.0
        %324 = vmatpush1.msra.mxu0 0.0
        %325 = vmatprep.subr.mxu0 0.0
        %326 = vmatpush1.msra.mxu0 0.0
        %327 = vmatprep.subr.mxu0 0.0
        %328 = vmatpush1.msra.mxu0 0.0
        %329 = vmatprep.subr.mxu0 0.0
        %330 = vmatpush1.msra.mxu0 0.0
        %331 = vmatprep.subr.mxu0 0.0
        %332 = vmatpush1.msra.mxu0 0.0
        %333 = vmatprep.subr.mxu0 0.0
        %334 = vmatpush1.msra.mxu0 0.0
        %335 = vmatprep.subr.mxu0 0.0
        %336 = vmatpush1.msra.mxu0 0.0
        %337 = vmatprep.subr.mxu0 0.0
        %338 = vmatpush1.msra.mxu0 0.0
        %339 = vmatprep.subr.mxu0 0.0
        %340 = vmatpush1.msra.mxu0 0.0
        %341 = vmatprep.subr.mxu0 0.0
        %342 = vmatpush1.msra.mxu0 0.0
        %343 = vmatprep.mubr.f32.mxu0 0.0
        %344 = vmatmul.mubr.f32.gmra.mrb[0].mxu0 %v262
        %v345 = vpop.f32.mrb[0].mxu0
        %v346 = vadd.f32 0.0, %v345
        %v347 = vpop.f32.mrb[0].mxu0
        %v348 = vadd.f32 0.0, %v347
        %349 = vmatprep.mubr.f32.mxu0 0.0
        %350 = vmatmul.mubr.f32.gmra.mrb[0].mxu0 %v265
        %v351 = vpop.f32.mrb[0].mxu0
        %v352 = vadd.f32 0.0, %v351
        %v353 = vpop.f32.mrb[0].mxu0
        %v354 = vadd.f32 0.0, %v353
        %355 = vmatprep.mubr.f32.mxu0 0.0
        %356 = vmatmul.mubr.f32.gmra.mrb[0].mxu0 %v268
        %v357 = vpop.f32.mrb[0].mxu0
        %v358 = vadd.f32 0.0, %v357
        %v359 = vpop.f32.mrb[0].mxu0
        %v360 = vadd.f32 0.0, %v359
        %361 = vmatprep.mubr.f32.mxu0 0.0
        %362 = vmatmul.mubr.f32.gmra.mrb[0].mxu0 %v271
        %v363 = vpop.f32.mrb[0].mxu0
        %v364 = vadd.f32 0.0, %v363
        %v365 = vpop.f32.mrb[0].mxu0
        %v366 = vadd.f32 0.0, %v365
        %367 = vmatprep.mubr.f32.mxu0 0.0
        %368 = vmatmul.mubr.f32.gmra.mrb[0].mxu0 %v274
        %v369 = vpop.f32.mrb[0].mxu0
        %v370 = vadd.f32 0.0, %v369
        %v371 = vpop.f32.mrb[0].mxu0
        %v372 = vadd.f32 0.0, %v371
        %373 = vmatprep.mubr.f32.mxu0 0.0
        %374 = vmatmul.mubr.f32.gmra.mrb[0].mxu0 %v277
        %v375 = vpop.f32.mrb[0].mxu0
        %v376 = vadd.f32 0.0, %v375
        %v377 = vpop.f32.mrb[0].mxu0
        %v378 = vadd.f32 0.0, %v377
        %379 = vdwg.mxu0
        %v380 = vld [vmem:[%s2] sm:$0xff]
        %v381 = vld [vmem:[%s2 + $0x8] sm:$0xff]
        %v382 = vld [vmem:[%s2 + $0x10] sm:$0xff]
        %v383 = vld [vmem:[%s2 + $0x18] sm:$0xff]
        %v384 = vld [vmem:[%s2 + $0x20] sm:$0xff]
        %v385 = vld [vmem:[%s2 + $0x28] sm:$0xff]
        %v386 = vld [vmem:[%s2 + $0x30] sm:$0xff]
        %v387 = vld [vmem:[%s2 + $0x38] sm:$0xff]
        %v388 = vld [vmem:[%s2 + $0x40] sm:$0xff]
        %v389 = vld [vmem:[%s2 + $0x48] sm:$0xff]
        %v390 = vld [vmem:[%s2 + $0x50] sm:$0xff]
        %v391 = vld [vmem:[%s2 + $0x58] sm:$0xff]
        %v392 = vld [vmem:[%s2 + $0x60] sm:$0xff]
        %v393 = vld [vmem:[%s2 + $0x68] sm:$0xff]
        %v394 = vld [vmem:[%s2 + $0x70] sm:$0xff]
        %v395 = vld [vmem:[%s2 + $0x78] sm:$0xff]
        %v396 = vld [vmem:[%s2 + $0x80] sm:$0xff]
        %v397 = vld [vmem:[%s2 + $0x88] sm:$0xff]
        %v398 = vld [vmem:[%s2 + $0x90] sm:$0xff]
        %v399 = vld [vmem:[%s2 + $0x98] sm:$0xff]
        %v400 = vld [vmem:[%s2 + $0xa0] sm:$0xff]
        %v401 = vld [vmem:[%s2 + $0xa8] sm:$0xff]
        %v402 = vld [vmem:[%s2 + $0xb0] sm:$0xff]
        %v403 = vld [vmem:[%s2 + $0xb8] sm:$0xff]
        %v404 = vld [vmem:[%s2 + $0xc0] sm:$0xff]
        %v405 = vld [vmem:[%s2 + $0xc8] sm:$0xff]
        %v406 = vld [vmem:[%s2 + $0xd0] sm:$0xff]
        %v407 = vld [vmem:[%s2 + $0xd8] sm:$0xff]
        %v409 = vsel %vm260, %v380, 0
        %v412 = vsel %vm260, %v381, 0
        %v415 = vsel %vm260, %v382, 0
        %v418 = vsel %vm260, %v383, 0
        %v421 = vsel %vm260, %v384, 0
        %v424 = vsel %vm260, %v385, 0
        %v427 = vsel %vm260, %v386, 0
        %v430 = vsel %vm260, %v387, 0
        %v433 = vsel %vm260, %v388, 0
        %v436 = vsel %vm260, %v389, 0
        %v439 = vsel %vm260, %v390, 0
        %v442 = vsel %vm260, %v391, 0
        %v445 = vsel %vm260, %v392, 0
        %v448 = vsel %vm260, %v393, 0
        %v451 = vsel %vm260, %v394, 0
        %v454 = vsel %vm260, %v395, 0
        %v457 = vsel %vm260, %v396, 0
        %v460 = vsel %vm260, %v397, 0
        %v463 = vsel %vm260, %v398, 0
        %v466 = vsel %vm260, %v399, 0
        %v469 = vsel %vm260, %v400, 0
        %v472 = vsel %vm260, %v401, 0
        %v475 = vsel %vm260, %v402, 0
        %v478 = vsel %vm260, %v403, 0
        %v481 = vsel %vm260, %v404, 0
        %v484 = vsel %vm260, %v405, 0
        %v487 = vsel %vm260, %v406, 0
        %v490 = vsel %vm260, %v407, 0
        %492 = vmatprep.subr.mxu0 %v348
        %493 = vmatpush1.msra.mxu0 %v346
        %494 = vmatprep.subr.mxu0 %v354
        %495 = vmatpush1.msra.mxu0 %v352
        %496 = vmatprep.subr.mxu0 0.0
        %497 = vmatpush1.msra.mxu0 0.0
        %498 = vmatprep.subr.mxu0 0.0
        %499 = vmatpush1.msra.mxu0 0.0
        %500 = vmatprep.subr.mxu0 0.0
        %501 = vmatpush1.msra.mxu0 0.0
        %502 = vmatprep.subr.mxu0 0.0
        %503 = vmatpush1.msra.mxu0 0.0
        %504 = vmatprep.subr.mxu0 0.0
        %505 = vmatpush1.msra.mxu0 0.0
        %506 = vmatprep.subr.mxu0 0.0
        %507 = vmatpush1.msra.mxu0 0.0
        %508 = vmatprep.subr.mxu0 0.0
        %509 = vmatpush1.msra.mxu0 0.0
        %510 = vmatprep.subr.mxu0 0.0
        %511 = vmatpush1.msra.mxu0 0.0
        %512 = vmatprep.subr.mxu0 0.0
        %513 = vmatpush1.msra.mxu0 0.0
        %514 = vmatprep.subr.mxu0 0.0
        %515 = vmatpush1.msra.mxu0 0.0
        %516 = vmatprep.subr.mxu0 0.0
        %517 = vmatpush1.msra.mxu0 0.0
        %518 = vmatprep.subr.mxu0 0.0
        %519 = vmatpush1.msra.mxu0 0.0
        %520 = vmatprep.subr.mxu0 0.0
        %521 = vmatpush1.msra.mxu0 0.0
        %522 = vmatprep.subr.mxu0 0.0
        %523 = vmatpush1.msra.mxu0 0.0
        %524 = vmatprep.subr.mxu0 0.0
        %525 = vmatpush1.msra.mxu0 0.0
        %526 = vmatprep.subr.mxu0 0.0
        %527 = vmatpush1.msra.mxu0 0.0
        %528 = vmatprep.subr.mxu0 0.0
        %529 = vmatpush1.msra.mxu0 0.0
        %530 = vmatprep.subr.mxu0 0.0
        %531 = vmatpush1.msra.mxu0 0.0
        %532 = vmatprep.subr.mxu0 0.0
        %533 = vmatpush1.msra.mxu0 0.0
        %534 = vmatprep.subr.mxu0 0.0
        %535 = vmatpush1.msra.mxu0 0.0
        %536 = vmatprep.subr.mxu0 0.0
        %537 = vmatpush1.msra.mxu0 0.0
        %538 = vmatprep.subr.mxu0 0.0
        %539 = vmatpush1.msra.mxu0 0.0
        %540 = vmatprep.subr.mxu0 0.0
        %541 = vmatpush1.msra.mxu0 0.0
        %542 = vmatprep.subr.mxu0 0.0
        %543 = vmatpush1.msra.mxu0 0.0
        %544 = vmatprep.subr.mxu0 0.0
        %545 = vmatpush1.msra.mxu0 0.0
        %546 = vmatprep.subr.mxu0 0.0
        %547 = vmatpush1.msra.mxu0 0.0
        %548 = vmatprep.subr.mxu0 0.0
        %549 = vmatpush1.msra.mxu0 0.0
        %550 = vmatprep.subr.mxu0 0.0
        %551 = vmatpush1.msra.mxu0 0.0
        %552 = vmatprep.subr.mxu0 0.0
        %553 = vmatpush1.msra.mxu0 0.0
        %554 = vmatprep.subr.mxu0 0.0
        %555 = vmatpush1.msra.mxu0 0.0
        %556 = vmatprep.mubr.f32.mxu0 0.0
        %557 = vmatmul.mubr.f32.gmra.mrb[0].mxu0 %v409
        %v558 = vpop.f32.mrb[0].mxu0
        %v559 = vadd.f32 0.0, %v558
        %v560 = vpop.f32.mrb[0].mxu0
        %v561 = vadd.f32 0.0, %v560
        %562 = vmatprep.mubr.f32.mxu0 0.0
        %563 = vmatmul.mubr.f32.gmra.mrb[0].mxu0 %v412
        %v564 = vpop.f32.mrb[0].mxu0
        %v565 = vadd.f32 0.0, %v564
        %v566 = vpop.f32.mrb[0].mxu0
        %v567 = vadd.f32 0.0, %v566
        %568 = vmatprep.mubr.f32.mxu0 0.0
        %569 = vmatmul.mubr.f32.gmra.mrb[0].mxu0 %v415
        %v570 = vpop.f32.mrb[0].mxu0
        %v571 = vadd.f32 0.0, %v570
        %v572 = vpop.f32.mrb[0].mxu0
        %v573 = vadd.f32 0.0, %v572
        %574 = vmatprep.mubr.f32.mxu0 0.0
        %575 = vmatmul.mubr.f32.gmra.mrb[0].mxu0 %v418
        %v576 = vpop.f32.mrb[0].mxu0
        %v577 = vadd.f32 0.0, %v576
        %v578 = vpop.f32.mrb[0].mxu0
        %v579 = vadd.f32 0.0, %v578
        %580 = vmatprep.mubr.f32.mxu0 0.0
        %581 = vmatmul.mubr.f32.gmra.mrb[0].mxu0 %v421
        %v582 = vpop.f32.mrb[0].mxu0
        %v583 = vadd.f32 0.0, %v582
        %v584 = vpop.f32.mrb[0].mxu0
        %v585 = vadd.f32 0.0, %v584
        %586 = vmatprep.mubr.f32.mxu0 0.0
        %587 = vmatmul.mubr.f32.gmra.mrb[0].mxu0 %v424
        %v588 = vpop.f32.mrb[0].mxu0
        %v589 = vadd.f32 0.0, %v588
        %v590 = vpop.f32.mrb[0].mxu0
        %v591 = vadd.f32 0.0, %v590
        %592 = vmatprep.mubr.f32.mxu0 0.0
        %593 = vmatmul.mubr.f32.gmra.mrb[0].mxu0 %v427
        %v594 = vpop.f32.mrb[0].mxu0
        %v595 = vadd.f32 0.0, %v594
        %v596 = vpop.f32.mrb[0].mxu0
        %v597 = vadd.f32 0.0, %v596
        %598 = vmatprep.mubr.f32.mxu0 0.0
        %599 = vmatmul.mubr.f32.gmra.mrb[0].mxu0 %v430
        %v600 = vpop.f32.mrb[0].mxu0
        %v601 = vadd.f32 0.0, %v600
        %v602 = vpop.f32.mrb[0].mxu0
        %v603 = vadd.f32 0.0, %v602
        %604 = vmatprep.mubr.f32.mxu0 0.0
        %605 = vmatmul.mubr.f32.gmra.mrb[0].mxu0 %v433
        %v606 = vpop.f32.mrb[0].mxu0
        %v607 = vadd.f32 0.0, %v606
        %v608 = vpop.f32.mrb[0].mxu0
        %v609 = vadd.f32 0.0, %v608
        %610 = vmatprep.mubr.f32.mxu0 0.0
        %611 = vmatmul.mubr.f32.gmra.mrb[0].mxu0 %v436
        %v612 = vpop.f32.mrb[0].mxu0
        %v613 = vadd.f32 0.0, %v612
        %v614 = vpop.f32.mrb[0].mxu0
        %v615 = vadd.f32 0.0, %v614
        %616 = vmatprep.mubr.f32.mxu0 0.0
        %617 = vmatmul.mubr.f32.gmra.mrb[0].mxu0 %v439
        %v618 = vpop.f32.mrb[0].mxu0
        %v619 = vadd.f32 0.0, %v618
        %v620 = vpop.f32.mrb[0].mxu0
        %v621 = vadd.f32 0.0, %v620
        %622 = vmatprep.mubr.f32.mxu0 0.0
        %623 = vmatmul.mubr.f32.gmra.mrb[0].mxu0 %v442
        %v624 = vpop.f32.mrb[0].mxu0
        %v625 = vadd.f32 0.0, %v624
        %v626 = vpop.f32.mrb[0].mxu0
        %v627 = vadd.f32 0.0, %v626
        %628 = vmatprep.mubr.f32.mxu0 0.0
        %629 = vmatmul.mubr.f32.gmra.mrb[0].mxu0 %v445
        %v630 = vpop.f32.mrb[0].mxu0
        %v631 = vadd.f32 0.0, %v630
        %v632 = vpop.f32.mrb[0].mxu0
        %v633 = vadd.f32 0.0, %v632
        %634 = vmatprep.mubr.f32.mxu0 0.0
        %635 = vmatmul.mubr.f32.gmra.mrb[0].mxu0 %v448
        %v636 = vpop.f32.mrb[0].mxu0
        %v637 = vadd.f32 0.0, %v636
        %v638 = vpop.f32.mrb[0].mxu0
        %v639 = vadd.f32 0.0, %v638
        %640 = vmatprep.mubr.f32.mxu0 0.0
        %641 = vmatmul.mubr.f32.gmra.mrb[0].mxu0 %v451
        %v642 = vpop.f32.mrb[0].mxu0
        %v643 = vadd.f32 0.0, %v642
        %v644 = vpop.f32.mrb[0].mxu0
        %v645 = vadd.f32 0.0, %v644
        %646 = vmatprep.mubr.f32.mxu0 0.0
        %647 = vmatmul.mubr.f32.gmra.mrb[0].mxu0 %v454
        %v648 = vpop.f32.mrb[0].mxu0
        %v649 = vadd.f32 0.0, %v648
        %v650 = vpop.f32.mrb[0].mxu0
        %v651 = vadd.f32 0.0, %v650
        %652 = vmatprep.mubr.f32.mxu0 0.0
        %653 = vmatmul.mubr.f32.gmra.mrb[0].mxu0 %v457
        %v654 = vpop.f32.mrb[0].mxu0
        %v655 = vadd.f32 0.0, %v654
        %v656 = vpop.f32.mrb[0].mxu0
        %v657 = vadd.f32 0.0, %v656
        %658 = vmatprep.mubr.f32.mxu0 0.0
        %659 = vmatmul.mubr.f32.gmra.mrb[0].mxu0 %v460
        %v660 = vpop.f32.mrb[0].mxu0
        %v661 = vadd.f32 0.0, %v660
        %v662 = vpop.f32.mrb[0].mxu0
        %v663 = vadd.f32 0.0, %v662
        %664 = vmatprep.mubr.f32.mxu0 0.0
        %665 = vmatmul.mubr.f32.gmra.mrb[0].mxu0 %v463
        %v666 = vpop.f32.mrb[0].mxu0
        %v667 = vadd.f32 0.0, %v666
        %v668 = vpop.f32.mrb[0].mxu0
        %v669 = vadd.f32 0.0, %v668
        %670 = vmatprep.mubr.f32.mxu0 0.0
        %671 = vmatmul.mubr.f32.gmra.mrb[0].mxu0 %v466
        %v672 = vpop.f32.mrb[0].mxu0
        %v673 = vadd.f32 0.0, %v672
        %v674 = vpop.f32.mrb[0].mxu0
        %v675 = vadd.f32 0.0, %v674
        %676 = vmatprep.mubr.f32.mxu0 0.0
        %677 = vmatmul.mubr.f32.gmra.mrb[0].mxu0 %v469
        %v678 = vpop.f32.mrb[0].mxu0
        %v679 = vadd.f32 0.0, %v678
        %v680 = vpop.f32.mrb[0].mxu0
        %v681 = vadd.f32 0.0, %v680
        %682 = vmatprep.mubr.f32.mxu0 0.0
        %683 = vmatmul.mubr.f32.gmra.mrb[0].mxu0 %v472
        %v684 = vpop.f32.mrb[0].mxu0
        %v685 = vadd.f32 0.0, %v684
        %v686 = vpop.f32.mrb[0].mxu0
        %v687 = vadd.f32 0.0, %v686
        %688 = vmatprep.mubr.f32.mxu0 0.0
        %689 = vmatmul.mubr.f32.gmra.mrb[0].mxu0 %v475
        %v690 = vpop.f32.mrb[0].mxu0
        %v691 = vadd.f32 0.0, %v690
        %v692 = vpop.f32.mrb[0].mxu0
        %v693 = vadd.f32 0.0, %v692
        %694 = vmatprep.mubr.f32.mxu0 0.0
        %695 = vmatmul.mubr.f32.gmra.mrb[0].mxu0 %v478
        %v696 = vpop.f32.mrb[0].mxu0
        %v697 = vadd.f32 0.0, %v696
        %v698 = vpop.f32.mrb[0].mxu0
        %v699 = vadd.f32 0.0, %v698
        %700 = vmatprep.mubr.f32.mxu0 0.0
        %701 = vmatmul.mubr.f32.gmra.mrb[0].mxu0 %v481
        %v702 = vpop.f32.mrb[0].mxu0
        %v703 = vadd.f32 0.0, %v702
        %v704 = vpop.f32.mrb[0].mxu0
        %v705 = vadd.f32 0.0, %v704
        %706 = vmatprep.mubr.f32.mxu0 0.0
        %707 = vmatmul.mubr.f32.gmra.mrb[0].mxu0 %v484
        %v708 = vpop.f32.mrb[0].mxu0
        %v709 = vadd.f32 0.0, %v708
        %v710 = vpop.f32.mrb[0].mxu0
        %v711 = vadd.f32 0.0, %v710
        %712 = vmatprep.mubr.f32.mxu0 0.0
        %713 = vmatmul.mubr.f32.gmra.mrb[0].mxu0 %v487
        %v714 = vpop.f32.mrb[0].mxu0
        %v715 = vadd.f32 0.0, %v714
        %v716 = vpop.f32.mrb[0].mxu0
        %v717 = vadd.f32 0.0, %v716
        %718 = vmatprep.mubr.f32.mxu0 0.0
        %719 = vmatmul.mubr.f32.gmra.mrb[0].mxu0 %v490
        %v720 = vpop.f32.mrb[0].mxu0
        %v721 = vadd.f32 0.0, %v720
        %v722 = vpop.f32.mrb[0].mxu0
        %v723 = vadd.f32 0.0, %v722
        %724 = vdwg.mxu0
        %s725 = sld [smem:[#allocation2]]
        %v726 = vstv %s725
        %v727 = vmul.f32 %v559, %v726
        %v728 = vmul.f32 %v561, %v726
        %v729 = vmul.f32 %v565, %v726
        %v730 = vmul.f32 %v567, %v726
        %v731 = vmul.f32 %v571, %v726
        %v732 = vmul.f32 %v573, %v726
        %v733 = vmul.f32 %v577, %v726
        %v734 = vmul.f32 %v579, %v726
        %v735 = vmul.f32 %v583, %v726
        %v736 = vmul.f32 %v585, %v726
        %v737 = vmul.f32 %v589, %v726
        %v738 = vmul.f32 %v591, %v726
        %v739 = vmul.f32 %v595, %v726
        %v740 = vmul.f32 %v597, %v726
        %v741 = vmul.f32 %v601, %v726
        %v742 = vmul.f32 %v603, %v726
        %v743 = vmul.f32 %v607, %v726
        %v744 = vmul.f32 %v609, %v726
        %v745 = vmul.f32 %v613, %v726
        %v746 = vmul.f32 %v615, %v726
        %v747 = vmul.f32 %v619, %v726
        %v748 = vmul.f32 %v621, %v726
        %v749 = vmul.f32 %v625, %v726
        %v750 = vmul.f32 %v627, %v726
        %v751 = vmul.f32 %v631, %v726
        %v752 = vmul.f32 %v633, %v726
        %v753 = vmul.f32 %v637, %v726
        %v754 = vmul.f32 %v639, %v726
        %v755 = vmul.f32 %v643, %v726
        %v756 = vmul.f32 %v645, %v726
        %v757 = vmul.f32 %v649, %v726
        %v758 = vmul.f32 %v651, %v726
        %v759 = vmul.f32 %v655, %v726
        %v760 = vmul.f32 %v657, %v726
        %v761 = vmul.f32 %v661, %v726
        %v762 = vmul.f32 %v663, %v726
        %v763 = vmul.f32 %v667, %v726
        %v764 = vmul.f32 %v669, %v726
        %v765 = vmul.f32 %v673, %v726
        %v766 = vmul.f32 %v675, %v726
        %v767 = vmul.f32 %v679, %v726
        %v768 = vmul.f32 %v681, %v726
        %v769 = vmul.f32 %v685, %v726
        %v770 = vmul.f32 %v687, %v726
        %v771 = vmul.f32 %v691, %v726
        %v772 = vmul.f32 %v693, %v726
        %v773 = vmul.f32 %v697, %v726
        %v774 = vmul.f32 %v699, %v726
        %v775 = vmul.f32 %v703, %v726
        %v776 = vmul.f32 %v705, %v726
        %v777 = vmul.f32 %v709, %v726
        %v778 = vmul.f32 %v711, %v726
        %v779 = vmul.f32 %v715, %v726
        %v780 = vmul.f32 %v717, %v726
        %v781 = vmul.f32 %v721, %v726
        %v782 = vmul.f32 %v723, %v726
        %s783 = sld [smem:[#allocation5]]
        %v784 = vstv %s783
        %v785 = vadd.f32 %v727, %v784
        %v786 = vadd.f32 %v728, %v784
        %v787 = vadd.f32 %v729, %v784
        %v788 = vadd.f32 %v730, %v784
        %v789 = vadd.f32 %v731, %v784
        %v790 = vadd.f32 %v732, %v784
        %v791 = vadd.f32 %v733, %v784
        %v792 = vadd.f32 %v734, %v784
        %v793 = vadd.f32 %v735, %v784
        %v794 = vadd.f32 %v736, %v784
        %v795 = vadd.f32 %v737, %v784
        %v796 = vadd.f32 %v738, %v784
        %v797 = vadd.f32 %v739, %v784
        %v798 = vadd.f32 %v740, %v784
        %v799 = vadd.f32 %v741, %v784
        %v800 = vadd.f32 %v742, %v784
        %v801 = vadd.f32 %v743, %v784
        %v802 = vadd.f32 %v744, %v784
        %v803 = vadd.f32 %v745, %v784
        %v804 = vadd.f32 %v746, %v784
        %v805 = vadd.f32 %v747, %v784
        %v806 = vadd.f32 %v748, %v784
        %v807 = vadd.f32 %v749, %v784
        %v808 = vadd.f32 %v750, %v784
        %v809 = vadd.f32 %v751, %v784
        %v810 = vadd.f32 %v752, %v784
        %v811 = vadd.f32 %v753, %v784
        %v812 = vadd.f32 %v754, %v784
        %v813 = vadd.f32 %v755, %v784
        %v814 = vadd.f32 %v756, %v784
        %v815 = vadd.f32 %v757, %v784
        %v816 = vadd.f32 %v758, %v784
        %v817 = vadd.f32 %v759, %v784
        %v818 = vadd.f32 %v760, %v784
        %v819 = vadd.f32 %v761, %v784
        %v820 = vadd.f32 %v762, %v784
        %v821 = vadd.f32 %v763, %v784
        %v822 = vadd.f32 %v764, %v784
        %v823 = vadd.f32 %v765, %v784
        %v824 = vadd.f32 %v766, %v784
        %v825 = vadd.f32 %v767, %v784
        %v826 = vadd.f32 %v768, %v784
        %v827 = vadd.f32 %v769, %v784
        %v828 = vadd.f32 %v770, %v784
        %v829 = vadd.f32 %v771, %v784
        %v830 = vadd.f32 %v772, %v784
        %v831 = vadd.f32 %v773, %v784
        %v832 = vadd.f32 %v774, %v784
        %v833 = vadd.f32 %v775, %v784
        %v834 = vadd.f32 %v776, %v784
        %v835 = vadd.f32 %v777, %v784
        %v836 = vadd.f32 %v778, %v784
        %v837 = vadd.f32 %v779, %v784
        %v838 = vadd.f32 %v780, %v784
        %v839 = vadd.f32 %v781, %v784
        %v840 = vadd.f32 %v782, %v784
        %v841 = vpack.c.bf16 %v787, %v785
        %v842 = vpack.c.bf16 %v788, %v786
        %v843 = vpack.c.bf16 %v791, %v789
        %v844 = vpack.c.bf16 %v792, %v790
        %v845 = vpack.c.bf16 %v795, %v793
        %v846 = vpack.c.bf16 %v796, %v794
        %v847 = vpack.c.bf16 %v799, %v797
        %v848 = vpack.c.bf16 %v800, %v798
        %v849 = vpack.c.bf16 %v803, %v801
        %v850 = vpack.c.bf16 %v804, %v802
        %v851 = vpack.c.bf16 %v807, %v805
        %v852 = vpack.c.bf16 %v808, %v806
        %v853 = vpack.c.bf16 %v811, %v809
        %v854 = vpack.c.bf16 %v812, %v810
        %v855 = vpack.c.bf16 %v815, %v813
        %v856 = vpack.c.bf16 %v816, %v814
        %v857 = vpack.c.bf16 %v819, %v817
        %v858 = vpack.c.bf16 %v820, %v818
        %v859 = vpack.c.bf16 %v823, %v821
        %v860 = vpack.c.bf16 %v824, %v822
        %v861 = vpack.c.bf16 %v827, %v825
        %v862 = vpack.c.bf16 %v828, %v826
        %v863 = vpack.c.bf16 %v831, %v829
        %v864 = vpack.c.bf16 %v832, %v830
        %v865 = vpack.c.bf16 %v835, %v833
        %v866 = vpack.c.bf16 %v836, %v834
        %v867 = vpack.c.bf16 %v839, %v837
        %v868 = vpack.c.bf16 %v840, %v838
        %v897 = vunpack.c.l.b16 %v841
        %v898 = vunpack.c.l.b16 %v842
        %v899 = vunpack.c.h.b16 %v841
        %v900 = vunpack.c.h.b16 %v842
        %v901 = vunpack.c.l.b16 %v843
        %v902 = vunpack.c.l.b16 %v844
        %v903 = vunpack.c.h.b16 %v843
        %v904 = vunpack.c.h.b16 %v844
        %v905 = vunpack.c.l.b16 %v845
        %v906 = vunpack.c.l.b16 %v846
        %v907 = vunpack.c.h.b16 %v845
        %v908 = vunpack.c.h.b16 %v846
        %v909 = vunpack.c.l.b16 %v847
        %v910 = vunpack.c.l.b16 %v848
        %v911 = vunpack.c.h.b16 %v847
        %v912 = vunpack.c.h.b16 %v848
        %v913 = vunpack.c.l.b16 %v849
        %v914 = vunpack.c.l.b16 %v850
        %v915 = vunpack.c.h.b16 %v849
        %v916 = vunpack.c.h.b16 %v850
        %v917 = vunpack.c.l.b16 %v851
        %v918 = vunpack.c.l.b16 %v852
        %v919 = vunpack.c.h.b16 %v851
        %v920 = vunpack.c.h.b16 %v852
        %v921 = vunpack.c.l.b16 %v853
        %v922 = vunpack.c.l.b16 %v854
        %v923 = vunpack.c.h.b16 %v853
        %v924 = vunpack.c.h.b16 %v854
        %v925 = vunpack.c.l.b16 %v855
        %v926 = vunpack.c.l.b16 %v856
        %v927 = vunpack.c.h.b16 %v855
        %v928 = vunpack.c.h.b16 %v856
        %v929 = vunpack.c.l.b16 %v857
        %v930 = vunpack.c.l.b16 %v858
        %v931 = vunpack.c.h.b16 %v857
        %v932 = vunpack.c.h.b16 %v858
        %v933 = vunpack.c.l.b16 %v859
        %v934 = vunpack.c.l.b16 %v860
        %v935 = vunpack.c.h.b16 %v859
        %v936 = vunpack.c.h.b16 %v860
        %v937 = vunpack.c.l.b16 %v861
        %v938 = vunpack.c.l.b16 %v862
        %v939 = vunpack.c.h.b16 %v861
        %v940 = vunpack.c.h.b16 %v862
        %v941 = vunpack.c.l.b16 %v863
        %v942 = vunpack.c.l.b16 %v864
        %v943 = vunpack.c.h.b16 %v863
        %v944 = vunpack.c.h.b16 %v864
        %v945 = vunpack.c.l.b16 %v865
        %v946 = vunpack.c.l.b16 %v866
        %v947 = vunpack.c.h.b16 %v865
        %v948 = vunpack.c.h.b16 %v866
        %v949 = vunpack.c.l.b16 %v867
        %v950 = vunpack.c.l.b16 %v868
        %v951 = vunpack.c.h.b16 %v867
        %v952 = vunpack.c.h.b16 %v868
        %v953 = vpack.c.b16 %v898, %v897
        %v954 = vpack.c.b16 %v900, %v899
        %v955 = vpack.c.b16 %v902, %v901
        %v956 = vpack.c.b16 %v904, %v903
        %v957 = vpack.c.b16 %v906, %v905
        %v958 = vpack.c.b16 %v908, %v907
        %v959 = vpack.c.b16 %v910, %v909
        %v960 = vpack.c.b16 %v912, %v911
        %v961 = vpack.c.b16 %v914, %v913
        %v962 = vpack.c.b16 %v916, %v915
        %v963 = vpack.c.b16 %v918, %v917
        %v964 = vpack.c.b16 %v920, %v919
        %v965 = vpack.c.b16 %v922, %v921
        %v966 = vpack.c.b16 %v924, %v923
        %v967 = vpack.c.b16 %v926, %v925
        %v968 = vpack.c.b16 %v928, %v927
        %v969 = vpack.c.b16 %v930, %v929
        %v970 = vpack.c.b16 %v932, %v931
        %v971 = vpack.c.b16 %v934, %v933
        %v972 = vpack.c.b16 %v936, %v935
        %v973 = vpack.c.b16 %v938, %v937
        %v974 = vpack.c.b16 %v940, %v939
        %v975 = vpack.c.b16 %v942, %v941
        %v976 = vpack.c.b16 %v944, %v943
        %v977 = vpack.c.b16 %v946, %v945
        %v978 = vpack.c.b16 %v948, %v947
        %v979 = vpack.c.b16 %v950, %v949
        %v980 = vpack.c.b16 %v952, %v951
        %vm1009 = vcmask 1043456
        %vm1010 = vcmask 785412
        %vm1011 = vmor %vm1010, %vm1009
        %1012 = vst.msk [vmem:[%s244] sm:$0xff] %vm1011, %v953
        %1013 = vst.msk [vmem:[%s244 + $0x8] sm:$0xff] %vm1011, %v954
        %1014 = vst.msk [vmem:[%s244 + $0x10] sm:$0xff] %vm1011, %v955
        %1015 = vst.msk [vmem:[%s244 + $0x18] sm:$0xff] %vm1011, %v956
        %1016 = vst.msk [vmem:[%s244 + $0x20] sm:$0xff] %vm1011, %v957
        %1017 = vst.msk [vmem:[%s244 + $0x28] sm:$0xff] %vm1011, %v958
        %1018 = vst.msk [vmem:[%s244 + $0x30] sm:$0xff] %vm1011, %v959
        %1019 = vst.msk [vmem:[%s244 + $0x38] sm:$0xff] %vm1011, %v960
        %1020 = vst.msk [vmem:[%s244 + $0x40] sm:$0xff] %vm1011, %v961
        %1021 = vst.msk [vmem:[%s244 + $0x48] sm:$0xff] %vm1011, %v962
        %1022 = vst.msk [vmem:[%s244 + $0x50] sm:$0xff] %vm1011, %v963
        %1023 = vst.msk [vmem:[%s244 + $0x58] sm:$0xff] %vm1011, %v964
        %1024 = vst.msk [vmem:[%s244 + $0x60] sm:$0xff] %vm1011, %v965
        %1025 = vst.msk [vmem:[%s244 + $0x68] sm:$0xff] %vm1011, %v966
        %1026 = vst.msk [vmem:[%s244 + $0x70] sm:$0xff] %vm1011, %v967
        %1027 = vst.msk [vmem:[%s244 + $0x78] sm:$0xff] %vm1011, %v968
        %1028 = vst.msk [vmem:[%s244 + $0x80] sm:$0xff] %vm1011, %v969
        %1029 = vst.msk [vmem:[%s244 + $0x88] sm:$0xff] %vm1011, %v970
        %1030 = vst.msk [vmem:[%s244 + $0x90] sm:$0xff] %vm1011, %v971
        %1031 = vst.msk [vmem:[%s244 + $0x98] sm:$0xff] %vm1011, %v972
        %1032 = vst.msk [vmem:[%s244 + $0xa0] sm:$0xff] %vm1011, %v973
        %1033 = vst.msk [vmem:[%s244 + $0xa8] sm:$0xff] %vm1011, %v974
        %1034 = vst.msk [vmem:[%s244 + $0xb0] sm:$0xff] %vm1011, %v975
        %1035 = vst.msk [vmem:[%s244 + $0xb8] sm:$0xff] %vm1011, %v976
        %1036 = vst.msk [vmem:[%s244 + $0xc0] sm:$0xff] %vm1011, %v977
        %1037 = vst.msk [vmem:[%s244 + $0xc8] sm:$0xff] %vm1011, %v978
        %1038 = vst.msk [vmem:[%s244 + $0xd0] sm:$0xff] %vm1011, %v979
        %1039 = vst.msk [vmem:[%s244 + $0xd8] sm:$0xff] %vm1011, %v980
        %1040 = vmatprep.subr.mxu0 %v360
        %1041 = vmatpush1.msra.mxu0 %v358
        %1042 = vmatprep.subr.mxu0 %v366
        %1043 = vmatpush1.msra.mxu0 %v364
        %1044 = vmatprep.subr.mxu0 0.0
        %1045 = vmatpush1.msra.mxu0 0.0
        %1046 = vmatprep.subr.mxu0 0.0
        %1047 = vmatpush1.msra.mxu0 0.0
        %1048 = vmatprep.subr.mxu0 0.0
        %1049 = vmatpush1.msra.mxu0 0.0
        %1050 = vmatprep.subr.mxu0 0.0
        %1051 = vmatpush1.msra.mxu0 0.0
        %1052 = vmatprep.subr.mxu0 0.0
        %1053 = vmatpush1.msra.mxu0 0.0
        %1054 = vmatprep.subr.mxu0 0.0
        %1055 = vmatpush1.msra.mxu0 0.0
        %1056 = vmatprep.subr.mxu0 0.0
        %1057 = vmatpush1.msra.mxu0 0.0
        %1058 = vmatprep.subr.mxu0 0.0
        %1059 = vmatpush1.msra.mxu0 0.0
        %1060 = vmatprep.subr.mxu0 0.0
        %1061 = vmatpush1.msra.mxu0 0.0
        %1062 = vmatprep.subr.mxu0 0.0
        %1063 = vmatpush1.msra.mxu0 0.0
        %1064 = vmatprep.subr.mxu0 0.0
        %1065 = vmatpush1.msra.mxu0 0.0
        %1066 = vmatprep.subr.mxu0 0.0
        %1067 = vmatpush1.msra.mxu0 0.0
        %1068 = vmatprep.subr.mxu0 0.0
        %1069 = vmatpush1.msra.mxu0 0.0
        %1070 = vmatprep.subr.mxu0 0.0
        %1071 = vmatpush1.msra.mxu0 0.0
        %1072 = vmatprep.subr.mxu0 0.0
        %1073 = vmatpush1.msra.mxu0 0.0
        %1074 = vmatprep.subr.mxu0 0.0
        %1075 = vmatpush1.msra.mxu0 0.0
        %1076 = vmatprep.subr.mxu0 0.0
        %1077 = vmatpush1.msra.mxu0 0.0
        %1078 = vmatprep.subr.mxu0 0.0
        %1079 = vmatpush1.msra.mxu0 0.0
        %1080 = vmatprep.subr.mxu0 0.0
        %1081 = vmatpush1.msra.mxu0 0.0
        %1082 = vmatprep.subr.mxu0 0.0
        %1083 = vmatpush1.msra.mxu0 0.0
        %1084 = vmatprep.subr.mxu0 0.0
        %1085 = vmatpush1.msra.mxu0 0.0
        %1086 = vmatprep.subr.mxu0 0.0
        %1087 = vmatpush1.msra.mxu0 0.0
        %1088 = vmatprep.subr.mxu0 0.0
        %1089 = vmatpush1.msra.mxu0 0.0
        %1090 = vmatprep.subr.mxu0 0.0
        %1091 = vmatpush1.msra.mxu0 0.0
        %1092 = vmatprep.subr.mxu0 0.0
        %1093 = vmatpush1.msra.mxu0 0.0
        %1094 = vmatprep.subr.mxu0 0.0
        %1095 = vmatpush1.msra.mxu0 0.0
        %1096 = vmatprep.subr.mxu0 0.0
        %1097 = vmatpush1.msra.mxu0 0.0
        %1098 = vmatprep.subr.mxu0 0.0
        %1099 = vmatpush1.msra.mxu0 0.0
        %1100 = vmatprep.subr.mxu0 0.0
        %1101 = vmatpush1.msra.mxu0 0.0
        %1102 = vmatprep.subr.mxu0 0.0
        %1103 = vmatpush1.msra.mxu0 0.0
        %1104 = vmatprep.mubr.f32.mxu0 0.0
        %1105 = vmatmul.mubr.f32.gmra.mrb[0].mxu0 %v409
        %v1106 = vpop.f32.mrb[0].mxu0
        %v1107 = vadd.f32 0.0, %v1106
        %v1108 = vpop.f32.mrb[0].mxu0
        %v1109 = vadd.f32 0.0, %v1108
        %1110 = vmatprep.mubr.f32.mxu0 0.0
        %1111 = vmatmul.mubr.f32.gmra.mrb[0].mxu0 %v412
        %v1112 = vpop.f32.mrb[0].mxu0
        %v1113 = vadd.f32 0.0, %v1112
        %v1114 = vpop.f32.mrb[0].mxu0
        %v1115 = vadd.f32 0.0, %v1114
        %1116 = vmatprep.mubr.f32.mxu0 0.0
        %1117 = vmatmul.mubr.f32.gmra.mrb[0].mxu0 %v415
        %v1118 = vpop.f32.mrb[0].mxu0
        %v1119 = vadd.f32 0.0, %v1118
        %v1120 = vpop.f32.mrb[0].mxu0
        %v1121 = vadd.f32 0.0, %v1120
        %1122 = vmatprep.mubr.f32.mxu0 0.0
        %1123 = vmatmul.mubr.f32.gmra.mrb[0].mxu0 %v418
        %v1124 = vpop.f32.mrb[0].mxu0
        %v1125 = vadd.f32 0.0, %v1124
        %v1126 = vpop.f32.mrb[0].mxu0
        %v1127 = vadd.f32 0.0, %v1126
        %1128 = vmatprep.mubr.f32.mxu0 0.0
        %1129 = vmatmul.mubr.f32.gmra.mrb[0].mxu0 %v421
        %v1130 = vpop.f32.mrb[0].mxu0
        %v1131 = vadd.f32 0.0, %v1130
        %v1132 = vpop.f32.mrb[0].mxu0
        %v1133 = vadd.f32 0.0, %v1132
        %1134 = vmatprep.mubr.f32.mxu0 0.0
        %1135 = vmatmul.mubr.f32.gmra.mrb[0].mxu0 %v424
        %v1136 = vpop.f32.mrb[0].mxu0
        %v1137 = vadd.f32 0.0, %v1136
        %v1138 = vpop.f32.mrb[0].mxu0
        %v1139 = vadd.f32 0.0, %v1138
        %1140 = vmatprep.mubr.f32.mxu0 0.0
        %1141 = vmatmul.mubr.f32.gmra.mrb[0].mxu0 %v427
        %v1142 = vpop.f32.mrb[0].mxu0
        %v1143 = vadd.f32 0.0, %v1142
        %v1144 = vpop.f32.mrb[0].mxu0
        %v1145 = vadd.f32 0.0, %v1144
        %1146 = vmatprep.mubr.f32.mxu0 0.0
        %1147 = vmatmul.mubr.f32.gmra.mrb[0].mxu0 %v430
        %v1148 = vpop.f32.mrb[0].mxu0
        %v1149 = vadd.f32 0.0, %v1148
        %v1150 = vpop.f32.mrb[0].mxu0
        %v1151 = vadd.f32 0.0, %v1150
        %1152 = vmatprep.mubr.f32.mxu0 0.0
        %1153 = vmatmul.mubr.f32.gmra.mrb[0].mxu0 %v433
        %v1154 = vpop.f32.mrb[0].mxu0
        %v1155 = vadd.f32 0.0, %v1154
        %v1156 = vpop.f32.mrb[0].mxu0
        %v1157 = vadd.f32 0.0, %v1156
        %1158 = vmatprep.mubr.f32.mxu0 0.0
        %1159 = vmatmul.mubr.f32.gmra.mrb[0].mxu0 %v436
        %v1160 = vpop.f32.mrb[0].mxu0
        %v1161 = vadd.f32 0.0, %v1160
        %v1162 = vpop.f32.mrb[0].mxu0
        %v1163 = vadd.f32 0.0, %v1162
        %1164 = vmatprep.mubr.f32.mxu0 0.0
        %1165 = vmatmul.mubr.f32.gmra.mrb[0].mxu0 %v439
        %v1166 = vpop.f32.mrb[0].mxu0
        %v1167 = vadd.f32 0.0, %v1166
        %v1168 = vpop.f32.mrb[0].mxu0
        %v1169 = vadd.f32 0.0, %v1168
        %1170 = vmatprep.mubr.f32.mxu0 0.0
        %1171 = vmatmul.mubr.f32.gmra.mrb[0].mxu0 %v442
        %v1172 = vpop.f32.mrb[0].mxu0
        %v1173 = vadd.f32 0.0, %v1172
        %v1174 = vpop.f32.mrb[0].mxu0
        %v1175 = vadd.f32 0.0, %v1174
        %1176 = vmatprep.mubr.f32.mxu0 0.0
        %1177 = vmatmul.mubr.f32.gmra.mrb[0].mxu0 %v445
        %v1178 = vpop.f32.mrb[0].mxu0
        %v1179 = vadd.f32 0.0, %v1178
        %v1180 = vpop.f32.mrb[0].mxu0
        %v1181 = vadd.f32 0.0, %v1180
        %1182 = vmatprep.mubr.f32.mxu0 0.0
        %1183 = vmatmul.mubr.f32.gmra.mrb[0].mxu0 %v448
        %v1184 = vpop.f32.mrb[0].mxu0
        %v1185 = vadd.f32 0.0, %v1184
        %v1186 = vpop.f32.mrb[0].mxu0
        %v1187 = vadd.f32 0.0, %v1186
        %1188 = vmatprep.mubr.f32.mxu0 0.0
        %1189 = vmatmul.mubr.f32.gmra.mrb[0].mxu0 %v451
        %v1190 = vpop.f32.mrb[0].mxu0
        %v1191 = vadd.f32 0.0, %v1190
        %v1192 = vpop.f32.mrb[0].mxu0
        %v1193 = vadd.f32 0.0, %v1192
        %1194 = vmatprep.mubr.f32.mxu0 0.0
        %1195 = vmatmul.mubr.f32.gmra.mrb[0].mxu0 %v454
        %v1196 = vpop.f32.mrb[0].mxu0
        %v1197 = vadd.f32 0.0, %v1196
        %v1198 = vpop.f32.mrb[0].mxu0
        %v1199 = vadd.f32 0.0, %v1198
        %1200 = vmatprep.mubr.f32.mxu0 0.0
        %1201 = vmatmul.mubr.f32.gmra.mrb[0].mxu0 %v457
        %v1202 = vpop.f32.mrb[0].mxu0
        %v1203 = vadd.f32 0.0, %v1202
        %v1204 = vpop.f32.mrb[0].mxu0
        %v1205 = vadd.f32 0.0, %v1204
        %1206 = vmatprep.mubr.f32.mxu0 0.0
        %1207 = vmatmul.mubr.f32.gmra.mrb[0].mxu0 %v460
        %v1208 = vpop.f32.mrb[0].mxu0
        %v1209 = vadd.f32 0.0, %v1208
        %v1210 = vpop.f32.mrb[0].mxu0
        %v1211 = vadd.f32 0.0, %v1210
        %1212 = vmatprep.mubr.f32.mxu0 0.0
        %1213 = vmatmul.mubr.f32.gmra.mrb[0].mxu0 %v463
        %v1214 = vpop.f32.mrb[0].mxu0
        %v1215 = vadd.f32 0.0, %v1214
        %v1216 = vpop.f32.mrb[0].mxu0
        %v1217 = vadd.f32 0.0, %v1216
        %1218 = vmatprep.mubr.f32.mxu0 0.0
        %1219 = vmatmul.mubr.f32.gmra.mrb[0].mxu0 %v466
        %v1220 = vpop.f32.mrb[0].mxu0
        %v1221 = vadd.f32 0.0, %v1220
        %v1222 = vpop.f32.mrb[0].mxu0
        %v1223 = vadd.f32 0.0, %v1222
        %1224 = vmatprep.mubr.f32.mxu0 0.0
        %1225 = vmatmul.mubr.f32.gmra.mrb[0].mxu0 %v469
        %v1226 = vpop.f32.mrb[0].mxu0
        %v1227 = vadd.f32 0.0, %v1226
        %v1228 = vpop.f32.mrb[0].mxu0
        %v1229 = vadd.f32 0.0, %v1228
        %1230 = vmatprep.mubr.f32.mxu0 0.0
        %1231 = vmatmul.mubr.f32.gmra.mrb[0].mxu0 %v472
        %v1232 = vpop.f32.mrb[0].mxu0
        %v1233 = vadd.f32 0.0, %v1232
        %v1234 = vpop.f32.mrb[0].mxu0
        %v1235 = vadd.f32 0.0, %v1234
        %1236 = vmatprep.mubr.f32.mxu0 0.0
        %1237 = vmatmul.mubr.f32.gmra.mrb[0].mxu0 %v475
        %v1238 = vpop.f32.mrb[0].mxu0
        %v1239 = vadd.f32 0.0, %v1238
        %v1240 = vpop.f32.mrb[0].mxu0
        %v1241 = vadd.f32 0.0, %v1240
        %1242 = vmatprep.mubr.f32.mxu0 0.0
        %1243 = vmatmul.mubr.f32.gmra.mrb[0].mxu0 %v478
        %v1244 = vpop.f32.mrb[0].mxu0
        %v1245 = vadd.f32 0.0, %v1244
        %v1246 = vpop.f32.mrb[0].mxu0
        %v1247 = vadd.f32 0.0, %v1246
        %1248 = vmatprep.mubr.f32.mxu0 0.0
        %1249 = vmatmul.mubr.f32.gmra.mrb[0].mxu0 %v481
        %v1250 = vpop.f32.mrb[0].mxu0
        %v1251 = vadd.f32 0.0, %v1250
        %v1252 = vpop.f32.mrb[0].mxu0
        %v1253 = vadd.f32 0.0, %v1252
        %1254 = vmatprep.mubr.f32.mxu0 0.0
        %1255 = vmatmul.mubr.f32.gmra.mrb[0].mxu0 %v484
        %v1256 = vpop.f32.mrb[0].mxu0
        %v1257 = vadd.f32 0.0, %v1256
        %v1258 = vpop.f32.mrb[0].mxu0
        %v1259 = vadd.f32 0.0, %v1258
        %1260 = vmatprep.mubr.f32.mxu0 0.0
        %1261 = vmatmul.mubr.f32.gmra.mrb[0].mxu0 %v487
        %v1262 = vpop.f32.mrb[0].mxu0
        %v1263 = vadd.f32 0.0, %v1262
        %v1264 = vpop.f32.mrb[0].mxu0
        %v1265 = vadd.f32 0.0, %v1264
        %1266 = vmatprep.mubr.f32.mxu0 0.0
        %1267 = vmatmul.mubr.f32.gmra.mrb[0].mxu0 %v490
        %v1268 = vpop.f32.mrb[0].mxu0
        %v1269 = vadd.f32 0.0, %v1268
        %v1270 = vpop.f32.mrb[0].mxu0
        %v1271 = vadd.f32 0.0, %v1270
        %1272 = vdwg.mxu0
        %s1273 = sld [smem:[#allocation2 + $0x1]]
        %v1274 = vstv %s1273
        %v1275 = vmul.f32 %v1107, %v1274
        %v1276 = vmul.f32 %v1109, %v1274
        %v1277 = vmul.f32 %v1113, %v1274
        %v1278 = vmul.f32 %v1115, %v1274
        %v1279 = vmul.f32 %v1119, %v1274
        %v1280 = vmul.f32 %v1121, %v1274
        %v1281 = vmul.f32 %v1125, %v1274
        %v1282 = vmul.f32 %v1127, %v1274
        %v1283 = vmul.f32 %v1131, %v1274
        %v1284 = vmul.f32 %v1133, %v1274
        %v1285 = vmul.f32 %v1137, %v1274
        %v1286 = vmul.f32 %v1139, %v1274
        %v1287 = vmul.f32 %v1143, %v1274
        %v1288 = vmul.f32 %v1145, %v1274
        %v1289 = vmul.f32 %v1149, %v1274
        %v1290 = vmul.f32 %v1151, %v1274
        %v1291 = vmul.f32 %v1155, %v1274
        %v1292 = vmul.f32 %v1157, %v1274
        %v1293 = vmul.f32 %v1161, %v1274
        %v1294 = vmul.f32 %v1163, %v1274
        %v1295 = vmul.f32 %v1167, %v1274
        %v1296 = vmul.f32 %v1169, %v1274
        %v1297 = vmul.f32 %v1173, %v1274
        %v1298 = vmul.f32 %v1175, %v1274
        %v1299 = vmul.f32 %v1179, %v1274
        %v1300 = vmul.f32 %v1181, %v1274
        %v1301 = vmul.f32 %v1185, %v1274
        %v1302 = vmul.f32 %v1187, %v1274
        %v1303 = vmul.f32 %v1191, %v1274
        %v1304 = vmul.f32 %v1193, %v1274
        %v1305 = vmul.f32 %v1197, %v1274
        %v1306 = vmul.f32 %v1199, %v1274
        %v1307 = vmul.f32 %v1203, %v1274
        %v1308 = vmul.f32 %v1205, %v1274
        %v1309 = vmul.f32 %v1209, %v1274
        %v1310 = vmul.f32 %v1211, %v1274
        %v1311 = vmul.f32 %v1215, %v1274
        %v1312 = vmul.f32 %v1217, %v1274
        %v1313 = vmul.f32 %v1221, %v1274
        %v1314 = vmul.f32 %v1223, %v1274
        %v1315 = vmul.f32 %v1227, %v1274
        %v1316 = vmul.f32 %v1229, %v1274
        %v1317 = vmul.f32 %v1233, %v1274
        %v1318 = vmul.f32 %v1235, %v1274
        %v1319 = vmul.f32 %v1239, %v1274
        %v1320 = vmul.f32 %v1241, %v1274
        %v1321 = vmul.f32 %v1245, %v1274
        %v1322 = vmul.f32 %v1247, %v1274
        %v1323 = vmul.f32 %v1251, %v1274
        %v1324 = vmul.f32 %v1253, %v1274
        %v1325 = vmul.f32 %v1257, %v1274
        %v1326 = vmul.f32 %v1259, %v1274
        %v1327 = vmul.f32 %v1263, %v1274
        %v1328 = vmul.f32 %v1265, %v1274
        %v1329 = vmul.f32 %v1269, %v1274
        %v1330 = vmul.f32 %v1271, %v1274
        %s1331 = sld [smem:[#allocation5 + $0x1]]
        %v1332 = vstv %s1331
        %v1333 = vadd.f32 %v1275, %v1332
        %v1334 = vadd.f32 %v1276, %v1332
        %v1335 = vadd.f32 %v1277, %v1332
        %v1336 = vadd.f32 %v1278, %v1332
        %v1337 = vadd.f32 %v1279, %v1332
        %v1338 = vadd.f32 %v1280, %v1332
        %v1339 = vadd.f32 %v1281, %v1332
        %v1340 = vadd.f32 %v1282, %v1332
        %v1341 = vadd.f32 %v1283, %v1332
        %v1342 = vadd.f32 %v1284, %v1332
        %v1343 = vadd.f32 %v1285, %v1332
        %v1344 = vadd.f32 %v1286, %v1332
        %v1345 = vadd.f32 %v1287, %v1332
        %v1346 = vadd.f32 %v1288, %v1332
        %v1347 = vadd.f32 %v1289, %v1332
        %v1348 = vadd.f32 %v1290, %v1332
        %v1349 = vadd.f32 %v1291, %v1332
        %v1350 = vadd.f32 %v1292, %v1332
        %v1351 = vadd.f32 %v1293, %v1332
        %v1352 = vadd.f32 %v1294, %v1332
        %v1353 = vadd.f32 %v1295, %v1332
        %v1354 = vadd.f32 %v1296, %v1332
        %v1355 = vadd.f32 %v1297, %v1332
        %v1356 = vadd.f32 %v1298, %v1332
        %v1357 = vadd.f32 %v1299, %v1332
        %v1358 = vadd.f32 %v1300, %v1332
        %v1359 = vadd.f32 %v1301, %v1332
        %v1360 = vadd.f32 %v1302, %v1332
        %v1361 = vadd.f32 %v1303, %v1332
        %v1362 = vadd.f32 %v1304, %v1332
        %v1363 = vadd.f32 %v1305, %v1332
        %v1364 = vadd.f32 %v1306, %v1332
        %v1365 = vadd.f32 %v1307, %v1332
        %v1366 = vadd.f32 %v1308, %v1332
        %v1367 = vadd.f32 %v1309, %v1332
        %v1368 = vadd.f32 %v1310, %v1332
        %v1369 = vadd.f32 %v1311, %v1332
        %v1370 = vadd.f32 %v1312, %v1332
        %v1371 = vadd.f32 %v1313, %v1332
        %v1372 = vadd.f32 %v1314, %v1332
        %v1373 = vadd.f32 %v1315, %v1332
        %v1374 = vadd.f32 %v1316, %v1332
        %v1375 = vadd.f32 %v1317, %v1332
        %v1376 = vadd.f32 %v1318, %v1332
        %v1377 = vadd.f32 %v1319, %v1332
        %v1378 = vadd.f32 %v1320, %v1332
        %v1379 = vadd.f32 %v1321, %v1332
        %v1380 = vadd.f32 %v1322, %v1332
        %v1381 = vadd.f32 %v1323, %v1332
        %v1382 = vadd.f32 %v1324, %v1332
        %v1383 = vadd.f32 %v1325, %v1332
        %v1384 = vadd.f32 %v1326, %v1332
        %v1385 = vadd.f32 %v1327, %v1332
        %v1386 = vadd.f32 %v1328, %v1332
        %v1387 = vadd.f32 %v1329, %v1332
        %v1388 = vadd.f32 %v1330, %v1332
        %v1389 = vpack.c.bf16 %v1335, %v1333
        %v1390 = vpack.c.bf16 %v1336, %v1334
        %v1391 = vpack.c.bf16 %v1339, %v1337
        %v1392 = vpack.c.bf16 %v1340, %v1338
        %v1393 = vpack.c.bf16 %v1343, %v1341
        %v1394 = vpack.c.bf16 %v1344, %v1342
        %v1395 = vpack.c.bf16 %v1347, %v1345
        %v1396 = vpack.c.bf16 %v1348, %v1346
        %v1397 = vpack.c.bf16 %v1351, %v1349
        %v1398 = vpack.c.bf16 %v1352, %v1350
        %v1399 = vpack.c.bf16 %v1355, %v1353
        %v1400 = vpack.c.bf16 %v1356, %v1354
        %v1401 = vpack.c.bf16 %v1359, %v1357
        %v1402 = vpack.c.bf16 %v1360, %v1358
        %v1403 = vpack.c.bf16 %v1363, %v1361
        %v1404 = vpack.c.bf16 %v1364, %v1362
        %v1405 = vpack.c.bf16 %v1367, %v1365
        %v1406 = vpack.c.bf16 %v1368, %v1366
        %v1407 = vpack.c.bf16 %v1371, %v1369
        %v1408 = vpack.c.bf16 %v1372, %v1370
        %v1409 = vpack.c.bf16 %v1375, %v1373
        %v1410 = vpack.c.bf16 %v1376, %v1374
        %v1411 = vpack.c.bf16 %v1379, %v1377
        %v1412 = vpack.c.bf16 %v1380, %v1378
        %v1413 = vpack.c.bf16 %v1383, %v1381
        %v1414 = vpack.c.bf16 %v1384, %v1382
        %v1415 = vpack.c.bf16 %v1387, %v1385
        %v1416 = vpack.c.bf16 %v1388, %v1386
        %v1445 = vunpack.c.l.b16 %v1389
        %v1446 = vunpack.c.l.b16 %v1390
        %v1447 = vunpack.c.h.b16 %v1389
        %v1448 = vunpack.c.h.b16 %v1390
        %v1449 = vunpack.c.l.b16 %v1391
        %v1450 = vunpack.c.l.b16 %v1392
        %v1451 = vunpack.c.h.b16 %v1391
        %v1452 = vunpack.c.h.b16 %v1392
        %v1453 = vunpack.c.l.b16 %v1393
        %v1454 = vunpack.c.l.b16 %v1394
        %v1455 = vunpack.c.h.b16 %v1393
        %v1456 = vunpack.c.h.b16 %v1394
        %v1457 = vunpack.c.l.b16 %v1395
        %v1458 = vunpack.c.l.b16 %v1396
        %v1459 = vunpack.c.h.b16 %v1395
        %v1460 = vunpack.c.h.b16 %v1396
        %v1461 = vunpack.c.l.b16 %v1397
        %v1462 = vunpack.c.l.b16 %v1398
        %v1463 = vunpack.c.h.b16 %v1397
        %v1464 = vunpack.c.h.b16 %v1398
        %v1465 = vunpack.c.l.b16 %v1399
        %v1466 = vunpack.c.l.b16 %v1400
        %v1467 = vunpack.c.h.b16 %v1399
        %v1468 = vunpack.c.h.b16 %v1400
        %v1469 = vunpack.c.l.b16 %v1401
        %v1470 = vunpack.c.l.b16 %v1402
        %v1471 = vunpack.c.h.b16 %v1401
        %v1472 = vunpack.c.h.b16 %v1402
        %v1473 = vunpack.c.l.b16 %v1403
        %v1474 = vunpack.c.l.b16 %v1404
        %v1475 = vunpack.c.h.b16 %v1403
        %v1476 = vunpack.c.h.b16 %v1404
        %v1477 = vunpack.c.l.b16 %v1405
        %v1478 = vunpack.c.l.b16 %v1406
        %v1479 = vunpack.c.h.b16 %v1405
        %v1480 = vunpack.c.h.b16 %v1406
        %v1481 = vunpack.c.l.b16 %v1407
        %v1482 = vunpack.c.l.b16 %v1408
        %v1483 = vunpack.c.h.b16 %v1407
        %v1484 = vunpack.c.h.b16 %v1408
        %v1485 = vunpack.c.l.b16 %v1409
        %v1486 = vunpack.c.l.b16 %v1410
        %v1487 = vunpack.c.h.b16 %v1409
        %v1488 = vunpack.c.h.b16 %v1410
        %v1489 = vunpack.c.l.b16 %v1411
        %v1490 = vunpack.c.l.b16 %v1412
        %v1491 = vunpack.c.h.b16 %v1411
        %v1492 = vunpack.c.h.b16 %v1412
        %v1493 = vunpack.c.l.b16 %v1413
        %v1494 = vunpack.c.l.b16 %v1414
        %v1495 = vunpack.c.h.b16 %v1413
        %v1496 = vunpack.c.h.b16 %v1414
        %v1497 = vunpack.c.l.b16 %v1415
        %v1498 = vunpack.c.l.b16 %v1416
        %v1499 = vunpack.c.h.b16 %v1415
        %v1500 = vunpack.c.h.b16 %v1416
        %v1501 = vpack.c.b16 %v1446, %v1445
        %v1502 = vpack.c.b16 %v1448, %v1447
        %v1503 = vpack.c.b16 %v1450, %v1449
        %v1504 = vpack.c.b16 %v1452, %v1451
        %v1505 = vpack.c.b16 %v1454, %v1453
        %v1506 = vpack.c.b16 %v1456, %v1455
        %v1507 = vpack.c.b16 %v1458, %v1457
        %v1508 = vpack.c.b16 %v1460, %v1459
        %v1509 = vpack.c.b16 %v1462, %v1461
        %v1510 = vpack.c.b16 %v1464, %v1463
        %v1511 = vpack.c.b16 %v1466, %v1465
        %v1512 = vpack.c.b16 %v1468, %v1467
        %v1513 = vpack.c.b16 %v1470, %v1469
        %v1514 = vpack.c.b16 %v1472, %v1471
        %v1515 = vpack.c.b16 %v1474, %v1473
        %v1516 = vpack.c.b16 %v1476, %v1475
        %v1517 = vpack.c.b16 %v1478, %v1477
        %v1518 = vpack.c.b16 %v1480, %v1479
        %v1519 = vpack.c.b16 %v1482, %v1481
        %v1520 = vpack.c.b16 %v1484, %v1483
        %v1521 = vpack.c.b16 %v1486, %v1485
        %v1522 = vpack.c.b16 %v1488, %v1487
        %v1523 = vpack.c.b16 %v1490, %v1489
        %v1524 = vpack.c.b16 %v1492, %v1491
        %v1525 = vpack.c.b16 %v1494, %v1493
        %v1526 = vpack.c.b16 %v1496, %v1495
        %v1527 = vpack.c.b16 %v1498, %v1497
        %v1528 = vpack.c.b16 %v1500, %v1499
        %s1557 = scalar_lea.vmem %s244, 224 [#allocation7]
        %1558 = vst.msk [vmem:[%s1557] sm:$0xff] %vm1011, %v1501
        %1559 = vst.msk [vmem:[%s1557 + $0x8] sm:$0xff] %vm1011, %v1502
        %1560 = vst.msk [vmem:[%s1557 + $0x10] sm:$0xff] %vm1011, %v1503
        %1561 = vst.msk [vmem:[%s1557 + $0x18] sm:$0xff] %vm1011, %v1504
        %1562 = vst.msk [vmem:[%s1557 + $0x20] sm:$0xff] %vm1011, %v1505
        %1563 = vst.msk [vmem:[%s1557 + $0x28] sm:$0xff] %vm1011, %v1506
        %1564 = vst.msk [vmem:[%s1557 + $0x30] sm:$0xff] %vm1011, %v1507
        %1565 = vst.msk [vmem:[%s1557 + $0x38] sm:$0xff] %vm1011, %v1508
        %1566 = vst.msk [vmem:[%s1557 + $0x40] sm:$0xff] %vm1011, %v1509
        %1567 = vst.msk [vmem:[%s1557 + $0x48] sm:$0xff] %vm1011, %v1510
        %1568 = vst.msk [vmem:[%s1557 + $0x50] sm:$0xff] %vm1011, %v1511
        %1569 = vst.msk [vmem:[%s1557 + $0x58] sm:$0xff] %vm1011, %v1512
        %1570 = vst.msk [vmem:[%s1557 + $0x60] sm:$0xff] %vm1011, %v1513
        %1571 = vst.msk [vmem:[%s1557 + $0x68] sm:$0xff] %vm1011, %v1514
        %1572 = vst.msk [vmem:[%s1557 + $0x70] sm:$0xff] %vm1011, %v1515
        %1573 = vst.msk [vmem:[%s1557 + $0x78] sm:$0xff] %vm1011, %v1516
        %1574 = vst.msk [vmem:[%s1557 + $0x80] sm:$0xff] %vm1011, %v1517
        %1575 = vst.msk [vmem:[%s1557 + $0x88] sm:$0xff] %vm1011, %v1518
        %1576 = vst.msk [vmem:[%s1557 + $0x90] sm:$0xff] %vm1011, %v1519
        %1577 = vst.msk [vmem:[%s1557 + $0x98] sm:$0xff] %vm1011, %v1520
        %1578 = vst.msk [vmem:[%s1557 + $0xa0] sm:$0xff] %vm1011, %v1521
        %1579 = vst.msk [vmem:[%s1557 + $0xa8] sm:$0xff] %vm1011, %v1522
        %1580 = vst.msk [vmem:[%s1557 + $0xb0] sm:$0xff] %vm1011, %v1523
        %1581 = vst.msk [vmem:[%s1557 + $0xb8] sm:$0xff] %vm1011, %v1524
        %1582 = vst.msk [vmem:[%s1557 + $0xc0] sm:$0xff] %vm1011, %v1525
        %1583 = vst.msk [vmem:[%s1557 + $0xc8] sm:$0xff] %vm1011, %v1526
        %1584 = vst.msk [vmem:[%s1557 + $0xd0] sm:$0xff] %vm1011, %v1527
        %1585 = vst.msk [vmem:[%s1557 + $0xd8] sm:$0xff] %vm1011, %v1528
        %1586 = vmatprep.subr.mxu0 %v372
        %1587 = vmatpush1.msra.mxu0 %v370
        %1588 = vmatprep.subr.mxu0 %v378
        %1589 = vmatpush1.msra.mxu0 %v376
        %1590 = vmatprep.subr.mxu0 0.0
        %1591 = vmatpush1.msra.mxu0 0.0
        %1592 = vmatprep.subr.mxu0 0.0
        %1593 = vmatpush1.msra.mxu0 0.0
        %1594 = vmatprep.subr.mxu0 0.0
        %1595 = vmatpush1.msra.mxu0 0.0
        %1596 = vmatprep.subr.mxu0 0.0
        %1597 = vmatpush1.msra.mxu0 0.0
        %1598 = vmatprep.subr.mxu0 0.0
        %1599 = vmatpush1.msra.mxu0 0.0
        %1600 = vmatprep.subr.mxu0 0.0
        %1601 = vmatpush1.msra.mxu0 0.0
        %1602 = vmatprep.subr.mxu0 0.0
        %1603 = vmatpush1.msra.mxu0 0.0
        %1604 = vmatprep.subr.mxu0 0.0
        %1605 = vmatpush1.msra.mxu0 0.0
        %1606 = vmatprep.subr.mxu0 0.0
        %1607 = vmatpush1.msra.mxu0 0.0
        %1608 = vmatprep.subr.mxu0 0.0
        %1609 = vmatpush1.msra.mxu0 0.0
        %1610 = vmatprep.subr.mxu0 0.0
        %1611 = vmatpush1.msra.mxu0 0.0
        %1612 = vmatprep.subr.mxu0 0.0
        %1613 = vmatpush1.msra.mxu0 0.0
        %1614 = vmatprep.subr.mxu0 0.0
        %1615 = vmatpush1.msra.mxu0 0.0
        %1616 = vmatprep.subr.mxu0 0.0
        %1617 = vmatpush1.msra.mxu0 0.0
        %1618 = vmatprep.subr.mxu0 0.0
        %1619 = vmatpush1.msra.mxu0 0.0
        %1620 = vmatprep.subr.mxu0 0.0
        %1621 = vmatpush1.msra.mxu0 0.0
        %1622 = vmatprep.subr.mxu0 0.0
        %1623 = vmatpush1.msra.mxu0 0.0
        %1624 = vmatprep.subr.mxu0 0.0
        %1625 = vmatpush1.msra.mxu0 0.0
        %1626 = vmatprep.subr.mxu0 0.0
        %1627 = vmatpush1.msra.mxu0 0.0
        %1628 = vmatprep.subr.mxu0 0.0
        %1629 = vmatpush1.msra.mxu0 0.0
        %1630 = vmatprep.subr.mxu0 0.0
        %1631 = vmatpush1.msra.mxu0 0.0
        %1632 = vmatprep.subr.mxu0 0.0
        %1633 = vmatpush1.msra.mxu0 0.0
        %1634 = vmatprep.subr.mxu0 0.0
        %1635 = vmatpush1.msra.mxu0 0.0
        %1636 = vmatprep.subr.mxu0 0.0
        %1637 = vmatpush1.msra.mxu0 0.0
        %1638 = vmatprep.subr.mxu0 0.0
        %1639 = vmatpush1.msra.mxu0 0.0
        %1640 = vmatprep.subr.mxu0 0.0
        %1641 = vmatpush1.msra.mxu0 0.0
        %1642 = vmatprep.subr.mxu0 0.0
        %1643 = vmatpush1.msra.mxu0 0.0
        %1644 = vmatprep.subr.mxu0 0.0
        %1645 = vmatpush1.msra.mxu0 0.0
        %1646 = vmatprep.subr.mxu0 0.0
        %1647 = vmatpush1.msra.mxu0 0.0
        %1648 = vmatprep.subr.mxu0 0.0
        %1649 = vmatpush1.msra.mxu0 0.0
        %1650 = vmatprep.mubr.f32.mxu0 0.0
        %1651 = vmatmul.mubr.f32.gmra.mrb[0].mxu0 %v409
        %v1652 = vpop.f32.mrb[0].mxu0
        %v1653 = vadd.f32 0.0, %v1652
        %v1654 = vpop.f32.mrb[0].mxu0
        %v1655 = vadd.f32 0.0, %v1654
        %1656 = vmatprep.mubr.f32.mxu0 0.0
        %1657 = vmatmul.mubr.f32.gmra.mrb[0].mxu0 %v412
        %v1658 = vpop.f32.mrb[0].mxu0
        %v1659 = vadd.f32 0.0, %v1658
        %v1660 = vpop.f32.mrb[0].mxu0
        %v1661 = vadd.f32 0.0, %v1660
        %1662 = vmatprep.mubr.f32.mxu0 0.0
        %1663 = vmatmul.mubr.f32.gmra.mrb[0].mxu0 %v415
        %v1664 = vpop.f32.mrb[0].mxu0
        %v1665 = vadd.f32 0.0, %v1664
        %v1666 = vpop.f32.mrb[0].mxu0
        %v1667 = vadd.f32 0.0, %v1666
        %1668 = vmatprep.mubr.f32.mxu0 0.0
        %1669 = vmatmul.mubr.f32.gmra.mrb[0].mxu0 %v418
        %v1670 = vpop.f32.mrb[0].mxu0
        %v1671 = vadd.f32 0.0, %v1670
        %v1672 = vpop.f32.mrb[0].mxu0
        %v1673 = vadd.f32 0.0, %v1672
        %1674 = vmatprep.mubr.f32.mxu0 0.0
        %1675 = vmatmul.mubr.f32.gmra.mrb[0].mxu0 %v421
        %v1676 = vpop.f32.mrb[0].mxu0
        %v1677 = vadd.f32 0.0, %v1676
        %v1678 = vpop.f32.mrb[0].mxu0
        %v1679 = vadd.f32 0.0, %v1678
        %1680 = vmatprep.mubr.f32.mxu0 0.0
        %1681 = vmatmul.mubr.f32.gmra.mrb[0].mxu0 %v424
        %v1682 = vpop.f32.mrb[0].mxu0
        %v1683 = vadd.f32 0.0, %v1682
        %v1684 = vpop.f32.mrb[0].mxu0
        %v1685 = vadd.f32 0.0, %v1684
        %1686 = vmatprep.mubr.f32.mxu0 0.0
        %1687 = vmatmul.mubr.f32.gmra.mrb[0].mxu0 %v427
        %v1688 = vpop.f32.mrb[0].mxu0
        %v1689 = vadd.f32 0.0, %v1688
        %v1690 = vpop.f32.mrb[0].mxu0
        %v1691 = vadd.f32 0.0, %v1690
        %1692 = vmatprep.mubr.f32.mxu0 0.0
        %1693 = vmatmul.mubr.f32.gmra.mrb[0].mxu0 %v430
        %v1694 = vpop.f32.mrb[0].mxu0
        %v1695 = vadd.f32 0.0, %v1694
        %v1696 = vpop.f32.mrb[0].mxu0
        %v1697 = vadd.f32 0.0, %v1696
        %1698 = vmatprep.mubr.f32.mxu0 0.0
        %1699 = vmatmul.mubr.f32.gmra.mrb[0].mxu0 %v433
        %v1700 = vpop.f32.mrb[0].mxu0
        %v1701 = vadd.f32 0.0, %v1700
        %v1702 = vpop.f32.mrb[0].mxu0
        %v1703 = vadd.f32 0.0, %v1702
        %1704 = vmatprep.mubr.f32.mxu0 0.0
        %1705 = vmatmul.mubr.f32.gmra.mrb[0].mxu0 %v436
        %v1706 = vpop.f32.mrb[0].mxu0
        %v1707 = vadd.f32 0.0, %v1706
        %v1708 = vpop.f32.mrb[0].mxu0
        %v1709 = vadd.f32 0.0, %v1708
        %1710 = vmatprep.mubr.f32.mxu0 0.0
        %1711 = vmatmul.mubr.f32.gmra.mrb[0].mxu0 %v439
        %v1712 = vpop.f32.mrb[0].mxu0
        %v1713 = vadd.f32 0.0, %v1712
        %v1714 = vpop.f32.mrb[0].mxu0
        %v1715 = vadd.f32 0.0, %v1714
        %1716 = vmatprep.mubr.f32.mxu0 0.0
        %1717 = vmatmul.mubr.f32.gmra.mrb[0].mxu0 %v442
        %v1718 = vpop.f32.mrb[0].mxu0
        %v1719 = vadd.f32 0.0, %v1718
        %v1720 = vpop.f32.mrb[0].mxu0
        %v1721 = vadd.f32 0.0, %v1720
        %1722 = vmatprep.mubr.f32.mxu0 0.0
        %1723 = vmatmul.mubr.f32.gmra.mrb[0].mxu0 %v445
        %v1724 = vpop.f32.mrb[0].mxu0
        %v1725 = vadd.f32 0.0, %v1724
        %v1726 = vpop.f32.mrb[0].mxu0
        %v1727 = vadd.f32 0.0, %v1726
        %1728 = vmatprep.mubr.f32.mxu0 0.0
        %1729 = vmatmul.mubr.f32.gmra.mrb[0].mxu0 %v448
        %v1730 = vpop.f32.mrb[0].mxu0
        %v1731 = vadd.f32 0.0, %v1730
        %v1732 = vpop.f32.mrb[0].mxu0
        %v1733 = vadd.f32 0.0, %v1732
        %1734 = vmatprep.mubr.f32.mxu0 0.0
        %1735 = vmatmul.mubr.f32.gmra.mrb[0].mxu0 %v451
        %v1736 = vpop.f32.mrb[0].mxu0
        %v1737 = vadd.f32 0.0, %v1736
        %v1738 = vpop.f32.mrb[0].mxu0
        %v1739 = vadd.f32 0.0, %v1738
        %1740 = vmatprep.mubr.f32.mxu0 0.0
        %1741 = vmatmul.mubr.f32.gmra.mrb[0].mxu0 %v454
        %v1742 = vpop.f32.mrb[0].mxu0
        %v1743 = vadd.f32 0.0, %v1742
        %v1744 = vpop.f32.mrb[0].mxu0
        %v1745 = vadd.f32 0.0, %v1744
        %1746 = vmatprep.mubr.f32.mxu0 0.0
        %1747 = vmatmul.mubr.f32.gmra.mrb[0].mxu0 %v457
        %v1748 = vpop.f32.mrb[0].mxu0
        %v1749 = vadd.f32 0.0, %v1748
        %v1750 = vpop.f32.mrb[0].mxu0
        %v1751 = vadd.f32 0.0, %v1750
        %1752 = vmatprep.mubr.f32.mxu0 0.0
        %1753 = vmatmul.mubr.f32.gmra.mrb[0].mxu0 %v460
        %v1754 = vpop.f32.mrb[0].mxu0
        %v1755 = vadd.f32 0.0, %v1754
        %v1756 = vpop.f32.mrb[0].mxu0
        %v1757 = vadd.f32 0.0, %v1756
        %1758 = vmatprep.mubr.f32.mxu0 0.0
        %1759 = vmatmul.mubr.f32.gmra.mrb[0].mxu0 %v463
        %v1760 = vpop.f32.mrb[0].mxu0
        %v1761 = vadd.f32 0.0, %v1760
        %v1762 = vpop.f32.mrb[0].mxu0
        %v1763 = vadd.f32 0.0, %v1762
        %1764 = vmatprep.mubr.f32.mxu0 0.0
        %1765 = vmatmul.mubr.f32.gmra.mrb[0].mxu0 %v466
        %v1766 = vpop.f32.mrb[0].mxu0
        %v1767 = vadd.f32 0.0, %v1766
        %v1768 = vpop.f32.mrb[0].mxu0
        %v1769 = vadd.f32 0.0, %v1768
        %1770 = vmatprep.mubr.f32.mxu0 0.0
        %1771 = vmatmul.mubr.f32.gmra.mrb[0].mxu0 %v469
        %v1772 = vpop.f32.mrb[0].mxu0
        %v1773 = vadd.f32 0.0, %v1772
        %v1774 = vpop.f32.mrb[0].mxu0
        %v1775 = vadd.f32 0.0, %v1774
        %1776 = vmatprep.mubr.f32.mxu0 0.0
        %1777 = vmatmul.mubr.f32.gmra.mrb[0].mxu0 %v472
        %v1778 = vpop.f32.mrb[0].mxu0
        %v1779 = vadd.f32 0.0, %v1778
        %v1780 = vpop.f32.mrb[0].mxu0
        %v1781 = vadd.f32 0.0, %v1780
        %1782 = vmatprep.mubr.f32.mxu0 0.0
        %1783 = vmatmul.mubr.f32.gmra.mrb[0].mxu0 %v475
        %v1784 = vpop.f32.mrb[0].mxu0
        %v1785 = vadd.f32 0.0, %v1784
        %v1786 = vpop.f32.mrb[0].mxu0
        %v1787 = vadd.f32 0.0, %v1786
        %1788 = vmatprep.mubr.f32.mxu0 0.0
        %1789 = vmatmul.mubr.f32.gmra.mrb[0].mxu0 %v478
        %v1790 = vpop.f32.mrb[0].mxu0
        %v1791 = vadd.f32 0.0, %v1790
        %v1792 = vpop.f32.mrb[0].mxu0
        %v1793 = vadd.f32 0.0, %v1792
        %1794 = vmatprep.mubr.f32.mxu0 0.0
        %1795 = vmatmul.mubr.f32.gmra.mrb[0].mxu0 %v481
        %v1796 = vpop.f32.mrb[0].mxu0
        %v1797 = vadd.f32 0.0, %v1796
        %v1798 = vpop.f32.mrb[0].mxu0
        %v1799 = vadd.f32 0.0, %v1798
        %1800 = vmatprep.mubr.f32.mxu0 0.0
        %1801 = vmatmul.mubr.f32.gmra.mrb[0].mxu0 %v484
        %v1802 = vpop.f32.mrb[0].mxu0
        %v1803 = vadd.f32 0.0, %v1802
        %v1804 = vpop.f32.mrb[0].mxu0
        %v1805 = vadd.f32 0.0, %v1804
        %1806 = vmatprep.mubr.f32.mxu0 0.0
        %1807 = vmatmul.mubr.f32.gmra.mrb[0].mxu0 %v487
        %v1808 = vpop.f32.mrb[0].mxu0
        %v1809 = vadd.f32 0.0, %v1808
        %v1810 = vpop.f32.mrb[0].mxu0
        %v1811 = vadd.f32 0.0, %v1810
        %1812 = vmatprep.mubr.f32.mxu0 0.0
        %1813 = vmatmul.mubr.f32.gmra.mrb[0].mxu0 %v490
        %v1814 = vpop.f32.mrb[0].mxu0
        %v1815 = vadd.f32 0.0, %v1814
        %v1816 = vpop.f32.mrb[0].mxu0
        %v1817 = vadd.f32 0.0, %v1816
        %1818 = vdwg.mxu0
        %s1819 = sld [smem:[#allocation2 + $0x2]]
        %v1820 = vstv %s1819
        %v1821 = vmul.f32 %v1653, %v1820
        %v1822 = vmul.f32 %v1655, %v1820
        %v1823 = vmul.f32 %v1659, %v1820
        %v1824 = vmul.f32 %v1661, %v1820
        %v1825 = vmul.f32 %v1665, %v1820
        %v1826 = vmul.f32 %v1667, %v1820
        %v1827 = vmul.f32 %v1671, %v1820
        %v1828 = vmul.f32 %v1673, %v1820
        %v1829 = vmul.f32 %v1677, %v1820
        %v1830 = vmul.f32 %v1679, %v1820
        %v1831 = vmul.f32 %v1683, %v1820
        %v1832 = vmul.f32 %v1685, %v1820
        %v1833 = vmul.f32 %v1689, %v1820
        %v1834 = vmul.f32 %v1691, %v1820
        %v1835 = vmul.f32 %v1695, %v1820
        %v1836 = vmul.f32 %v1697, %v1820
        %v1837 = vmul.f32 %v1701, %v1820
        %v1838 = vmul.f32 %v1703, %v1820
        %v1839 = vmul.f32 %v1707, %v1820
        %v1840 = vmul.f32 %v1709, %v1820
        %v1841 = vmul.f32 %v1713, %v1820
        %v1842 = vmul.f32 %v1715, %v1820
        %v1843 = vmul.f32 %v1719, %v1820
        %v1844 = vmul.f32 %v1721, %v1820
        %v1845 = vmul.f32 %v1725, %v1820
        %v1846 = vmul.f32 %v1727, %v1820
        %v1847 = vmul.f32 %v1731, %v1820
        %v1848 = vmul.f32 %v1733, %v1820
        %v1849 = vmul.f32 %v1737, %v1820
        %v1850 = vmul.f32 %v1739, %v1820
        %v1851 = vmul.f32 %v1743, %v1820
        %v1852 = vmul.f32 %v1745, %v1820
        %v1853 = vmul.f32 %v1749, %v1820
        %v1854 = vmul.f32 %v1751, %v1820
        %v1855 = vmul.f32 %v1755, %v1820
        %v1856 = vmul.f32 %v1757, %v1820
        %v1857 = vmul.f32 %v1761, %v1820
        %v1858 = vmul.f32 %v1763, %v1820
        %v1859 = vmul.f32 %v1767, %v1820
        %v1860 = vmul.f32 %v1769, %v1820
        %v1861 = vmul.f32 %v1773, %v1820
        %v1862 = vmul.f32 %v1775, %v1820
        %v1863 = vmul.f32 %v1779, %v1820
        %v1864 = vmul.f32 %v1781, %v1820
        %v1865 = vmul.f32 %v1785, %v1820
        %v1866 = vmul.f32 %v1787, %v1820
        %v1867 = vmul.f32 %v1791, %v1820
        %v1868 = vmul.f32 %v1793, %v1820
        %v1869 = vmul.f32 %v1797, %v1820
        %v1870 = vmul.f32 %v1799, %v1820
        %v1871 = vmul.f32 %v1803, %v1820
        %v1872 = vmul.f32 %v1805, %v1820
        %v1873 = vmul.f32 %v1809, %v1820
        %v1874 = vmul.f32 %v1811, %v1820
        %v1875 = vmul.f32 %v1815, %v1820
        %v1876 = vmul.f32 %v1817, %v1820
        %s1877 = sld [smem:[#allocation5 + $0x2]]
        %v1878 = vstv %s1877
        %v1879 = vadd.f32 %v1821, %v1878
        %v1880 = vadd.f32 %v1822, %v1878
        %v1881 = vadd.f32 %v1823, %v1878
        %v1882 = vadd.f32 %v1824, %v1878
        %v1883 = vadd.f32 %v1825, %v1878
        %v1884 = vadd.f32 %v1826, %v1878
        %v1885 = vadd.f32 %v1827, %v1878
        %v1886 = vadd.f32 %v1828, %v1878
        %v1887 = vadd.f32 %v1829, %v1878
        %v1888 = vadd.f32 %v1830, %v1878
        %v1889 = vadd.f32 %v1831, %v1878
        %v1890 = vadd.f32 %v1832, %v1878
        %v1891 = vadd.f32 %v1833, %v1878
        %v1892 = vadd.f32 %v1834, %v1878
        %v1893 = vadd.f32 %v1835, %v1878
        %v1894 = vadd.f32 %v1836, %v1878
        %v1895 = vadd.f32 %v1837, %v1878
        %v1896 = vadd.f32 %v1838, %v1878
        %v1897 = vadd.f32 %v1839, %v1878
        %v1898 = vadd.f32 %v1840, %v1878
        %v1899 = vadd.f32 %v1841, %v1878
        %v1900 = vadd.f32 %v1842, %v1878
        %v1901 = vadd.f32 %v1843, %v1878
        %v1902 = vadd.f32 %v1844, %v1878
        %v1903 = vadd.f32 %v1845, %v1878
        %v1904 = vadd.f32 %v1846, %v1878
        %v1905 = vadd.f32 %v1847, %v1878
        %v1906 = vadd.f32 %v1848, %v1878
        %v1907 = vadd.f32 %v1849, %v1878
        %v1908 = vadd.f32 %v1850, %v1878
        %v1909 = vadd.f32 %v1851, %v1878
        %v1910 = vadd.f32 %v1852, %v1878
        %v1911 = vadd.f32 %v1853, %v1878
        %v1912 = vadd.f32 %v1854, %v1878
        %v1913 = vadd.f32 %v1855, %v1878
        %v1914 = vadd.f32 %v1856, %v1878
        %v1915 = vadd.f32 %v1857, %v1878
        %v1916 = vadd.f32 %v1858, %v1878
        %v1917 = vadd.f32 %v1859, %v1878
        %v1918 = vadd.f32 %v1860, %v1878
        %v1919 = vadd.f32 %v1861, %v1878
        %v1920 = vadd.f32 %v1862, %v1878
        %v1921 = vadd.f32 %v1863, %v1878
        %v1922 = vadd.f32 %v1864, %v1878
        %v1923 = vadd.f32 %v1865, %v1878
        %v1924 = vadd.f32 %v1866, %v1878
        %v1925 = vadd.f32 %v1867, %v1878
        %v1926 = vadd.f32 %v1868, %v1878
        %v1927 = vadd.f32 %v1869, %v1878
        %v1928 = vadd.f32 %v1870, %v1878
        %v1929 = vadd.f32 %v1871, %v1878
        %v1930 = vadd.f32 %v1872, %v1878
        %v1931 = vadd.f32 %v1873, %v1878
        %v1932 = vadd.f32 %v1874, %v1878
        %v1933 = vadd.f32 %v1875, %v1878
        %v1934 = vadd.f32 %v1876, %v1878
        %v1935 = vpack.c.bf16 %v1881, %v1879
        %v1936 = vpack.c.bf16 %v1882, %v1880
        %v1937 = vpack.c.bf16 %v1885, %v1883
        %v1938 = vpack.c.bf16 %v1886, %v1884
        %v1939 = vpack.c.bf16 %v1889, %v1887
        %v1940 = vpack.c.bf16 %v1890, %v1888
        %v1941 = vpack.c.bf16 %v1893, %v1891
        %v1942 = vpack.c.bf16 %v1894, %v1892
        %v1943 = vpack.c.bf16 %v1897, %v1895
        %v1944 = vpack.c.bf16 %v1898, %v1896
        %v1945 = vpack.c.bf16 %v1901, %v1899
        %v1946 = vpack.c.bf16 %v1902, %v1900
        %v1947 = vpack.c.bf16 %v1905, %v1903
        %v1948 = vpack.c.bf16 %v1906, %v1904
        %v1949 = vpack.c.bf16 %v1909, %v1907
        %v1950 = vpack.c.bf16 %v1910, %v1908
        %v1951 = vpack.c.bf16 %v1913, %v1911
        %v1952 = vpack.c.bf16 %v1914, %v1912
        %v1953 = vpack.c.bf16 %v1917, %v1915
        %v1954 = vpack.c.bf16 %v1918, %v1916
        %v1955 = vpack.c.bf16 %v1921, %v1919
        %v1956 = vpack.c.bf16 %v1922, %v1920
        %v1957 = vpack.c.bf16 %v1925, %v1923
        %v1958 = vpack.c.bf16 %v1926, %v1924
        %v1959 = vpack.c.bf16 %v1929, %v1927
        %v1960 = vpack.c.bf16 %v1930, %v1928
        %v1961 = vpack.c.bf16 %v1933, %v1931
        %v1962 = vpack.c.bf16 %v1934, %v1932
        %v1991 = vunpack.c.l.b16 %v1935
        %v1992 = vunpack.c.l.b16 %v1936
        %v1993 = vunpack.c.h.b16 %v1935
        %v1994 = vunpack.c.h.b16 %v1936
        %v1995 = vunpack.c.l.b16 %v1937
        %v1996 = vunpack.c.l.b16 %v1938
        %v1997 = vunpack.c.h.b16 %v1937
        %v1998 = vunpack.c.h.b16 %v1938
        %v1999 = vunpack.c.l.b16 %v1939
        %v2000 = vunpack.c.l.b16 %v1940
        %v2001 = vunpack.c.h.b16 %v1939
        %v2002 = vunpack.c.h.b16 %v1940
        %v2003 = vunpack.c.l.b16 %v1941
        %v2004 = vunpack.c.l.b16 %v1942
        %v2005 = vunpack.c.h.b16 %v1941
        %v2006 = vunpack.c.h.b16 %v1942
        %v2007 = vunpack.c.l.b16 %v1943
        %v2008 = vunpack.c.l.b16 %v1944
        %v2009 = vunpack.c.h.b16 %v1943
        %v2010 = vunpack.c.h.b16 %v1944
        %v2011 = vunpack.c.l.b16 %v1945
        %v2012 = vunpack.c.l.b16 %v1946
        %v2013 = vunpack.c.h.b16 %v1945
        %v2014 = vunpack.c.h.b16 %v1946
        %v2015 = vunpack.c.l.b16 %v1947
        %v2016 = vunpack.c.l.b16 %v1948
        %v2017 = vunpack.c.h.b16 %v1947
        %v2018 = vunpack.c.h.b16 %v1948
        %v2019 = vunpack.c.l.b16 %v1949
        %v2020 = vunpack.c.l.b16 %v1950
        %v2021 = vunpack.c.h.b16 %v1949
        %v2022 = vunpack.c.h.b16 %v1950
        %v2023 = vunpack.c.l.b16 %v1951
        %v2024 = vunpack.c.l.b16 %v1952
        %v2025 = vunpack.c.h.b16 %v1951
        %v2026 = vunpack.c.h.b16 %v1952
        %v2027 = vunpack.c.l.b16 %v1953
        %v2028 = vunpack.c.l.b16 %v1954
        %v2029 = vunpack.c.h.b16 %v1953
        %v2030 = vunpack.c.h.b16 %v1954
        %v2031 = vunpack.c.l.b16 %v1955
        %v2032 = vunpack.c.l.b16 %v1956
        %v2033 = vunpack.c.h.b16 %v1955
        %v2034 = vunpack.c.h.b16 %v1956
        %v2035 = vunpack.c.l.b16 %v1957
        %v2036 = vunpack.c.l.b16 %v1958
        %v2037 = vunpack.c.h.b16 %v1957
        %v2038 = vunpack.c.h.b16 %v1958
        %v2039 = vunpack.c.l.b16 %v1959
        %v2040 = vunpack.c.l.b16 %v1960
        %v2041 = vunpack.c.h.b16 %v1959
        %v2042 = vunpack.c.h.b16 %v1960
        %v2043 = vunpack.c.l.b16 %v1961
        %v2044 = vunpack.c.l.b16 %v1962
        %v2045 = vunpack.c.h.b16 %v1961
        %v2046 = vunpack.c.h.b16 %v1962
        %v2047 = vpack.c.b16 %v1992, %v1991
        %v2048 = vpack.c.b16 %v1994, %v1993
        %v2049 = vpack.c.b16 %v1996, %v1995
        %v2050 = vpack.c.b16 %v1998, %v1997
        %v2051 = vpack.c.b16 %v2000, %v1999
        %v2052 = vpack.c.b16 %v2002, %v2001
        %v2053 = vpack.c.b16 %v2004, %v2003
        %v2054 = vpack.c.b16 %v2006, %v2005
        %v2055 = vpack.c.b16 %v2008, %v2007
        %v2056 = vpack.c.b16 %v2010, %v2009
        %v2057 = vpack.c.b16 %v2012, %v2011
        %v2058 = vpack.c.b16 %v2014, %v2013
        %v2059 = vpack.c.b16 %v2016, %v2015
        %v2060 = vpack.c.b16 %v2018, %v2017
        %v2061 = vpack.c.b16 %v2020, %v2019
        %v2062 = vpack.c.b16 %v2022, %v2021
        %v2063 = vpack.c.b16 %v2024, %v2023
        %v2064 = vpack.c.b16 %v2026, %v2025
        %v2065 = vpack.c.b16 %v2028, %v2027
        %v2066 = vpack.c.b16 %v2030, %v2029
        %v2067 = vpack.c.b16 %v2032, %v2031
        %v2068 = vpack.c.b16 %v2034, %v2033
        %v2069 = vpack.c.b16 %v2036, %v2035
        %v2070 = vpack.c.b16 %v2038, %v2037
        %v2071 = vpack.c.b16 %v2040, %v2039
        %v2072 = vpack.c.b16 %v2042, %v2041
        %v2073 = vpack.c.b16 %v2044, %v2043
        %v2074 = vpack.c.b16 %v2046, %v2045
        %s2103 = scalar_lea.vmem %s244, 448 [#allocation7]
        %2104 = vst.msk [vmem:[%s2103] sm:$0xff] %vm1011, %v2047
        %2105 = vst.msk [vmem:[%s2103 + $0x8] sm:$0xff] %vm1011, %v2048
        %2106 = vst.msk [vmem:[%s2103 + $0x10] sm:$0xff] %vm1011, %v2049
        %2107 = vst.msk [vmem:[%s2103 + $0x18] sm:$0xff] %vm1011, %v2050
        %2108 = vst.msk [vmem:[%s2103 + $0x20] sm:$0xff] %vm1011, %v2051
        %2109 = vst.msk [vmem:[%s2103 + $0x28] sm:$0xff] %vm1011, %v2052
        %2110 = vst.msk [vmem:[%s2103 + $0x30] sm:$0xff] %vm1011, %v2053
        %2111 = vst.msk [vmem:[%s2103 + $0x38] sm:$0xff] %vm1011, %v2054
        %2112 = vst.msk [vmem:[%s2103 + $0x40] sm:$0xff] %vm1011, %v2055
        %2113 = vst.msk [vmem:[%s2103 + $0x48] sm:$0xff] %vm1011, %v2056
        %2114 = vst.msk [vmem:[%s2103 + $0x50] sm:$0xff] %vm1011, %v2057
        %2115 = vst.msk [vmem:[%s2103 + $0x58] sm:$0xff] %vm1011, %v2058
        %2116 = vst.msk [vmem:[%s2103 + $0x60] sm:$0xff] %vm1011, %v2059
        %2117 = vst.msk [vmem:[%s2103 + $0x68] sm:$0xff] %vm1011, %v2060
        %2118 = vst.msk [vmem:[%s2103 + $0x70] sm:$0xff] %vm1011, %v2061
        %2119 = vst.msk [vmem:[%s2103 + $0x78] sm:$0xff] %vm1011, %v2062
        %2120 = vst.msk [vmem:[%s2103 + $0x80] sm:$0xff] %vm1011, %v2063
        %2121 = vst.msk [vmem:[%s2103 + $0x88] sm:$0xff] %vm1011, %v2064
        %2122 = vst.msk [vmem:[%s2103 + $0x90] sm:$0xff] %vm1011, %v2065
        %2123 = vst.msk [vmem:[%s2103 + $0x98] sm:$0xff] %vm1011, %v2066
        %2124 = vst.msk [vmem:[%s2103 + $0xa0] sm:$0xff] %vm1011, %v2067
        %2125 = vst.msk [vmem:[%s2103 + $0xa8] sm:$0xff] %vm1011, %v2068
        %2126 = vst.msk [vmem:[%s2103 + $0xb0] sm:$0xff] %vm1011, %v2069
        %2127 = vst.msk [vmem:[%s2103 + $0xb8] sm:$0xff] %vm1011, %v2070
        %2128 = vst.msk [vmem:[%s2103 + $0xc0] sm:$0xff] %vm1011, %v2071
        %2129 = vst.msk [vmem:[%s2103 + $0xc8] sm:$0xff] %vm1011, %v2072
        %2130 = vst.msk [vmem:[%s2103 + $0xd0] sm:$0xff] %vm1011, %v2073
        %2131 = vst.msk [vmem:[%s2103 + $0xd8] sm:$0xff] %vm1011, %v2074
        %s2132 = sand.u32 %s139, 1
        %s2133 = scalar_lea.sflag [#allocation3], %s2132
        %s2134 = sand.u32 %s139, 1
        %s2135 = smul.addr %s2134, 672
        %s2136 = scalar_lea.vmem [#allocation7], %s2135
        // Predicated region
        $region49: #{tpu_custom_call.1} parent=39 // pred_check
          %p2137 = pneg %p149
        $region50: #{tpu_custom_call.1} parent=39 // pred_check_branch
          %2139 = sbr.rel (%p2137) target = $region52
        $region51: #{tpu_custom_call.1} parent=39 // pred_region
          %s2141 = ssub.s32 10752, 10752
          %2142 = vsyncadd %s2133, %s2141
          %s2143 = smul.addr %s21, 168
          %s2144 = smul.addr %s2143, 64
          %s2145 = scalar_lea.hbm %s5, %s2144
          %s2146 = sshll.u32 %s2136, 4
          %s2147 = int_to_ptr.vmem [resolvable:$true] %s2146
          %2152 = dma.vmem_to_hbm [thread:$0]  %s2147, 10752, %s2145, %s2133, 128, 128, 8
        $region52: #{tpu_custom_call.1} parent=39 // pred_fallthru
          _
      $region40: #{tpu_custom_call.1} parent=5 // pred_fallthru
        _
      %p2153 = scmp.le.s32.totalorder 2, %s16
      // Predicated region
      $region53: #{tpu_custom_call.1} parent=5 // pred_check
        %p2154 = pneg %p2153
      $region54: #{tpu_custom_call.1} parent=5 // pred_check_branch
        %2156 = sbr.rel (%p2154) target = $region56
      $region55: #{tpu_custom_call.1} parent=5 // pred_region
        %s2157 = ssub.s32 %s16, 2
        // Predicated region
        $region57: #{tpu_custom_call.1} parent=55 // pred_check
          %p2158 = pneg %p155
        $region58: #{tpu_custom_call.1} parent=55 // pred_check_branch
          %2160 = sbr.rel (%p2158) target = $region60
        $region59: #{tpu_custom_call.1} parent=55 // pred_region
          %s2161 = sand.u32 %s140, 1
          %s2162 = scalar_lea.sflag [#allocation3], %s2161
          %s2163 = sand.u32 %s140, 1
          %s2164 = smul.addr %s2163, 672
          %s2165 = scalar_lea.vmem [#allocation7], %s2164
          %2166 = dma.done %s2162, 10752
        $region60: #{tpu_custom_call.1} parent=55 // pred_fallthru
          _
      $region56: #{tpu_custom_call.1} parent=5 // pred_fallthru
        _
    $region6: #{tpu_custom_call.1} parent=1 // loop_footer
      %s20 = sadd.s32 1, %s16
    $region7: #{tpu_custom_call.1} parent=1 // loop_footer_branch
      %15 = sbr.rel target = $region3
    $region8: #{tpu_custom_call.1} parent=1 // loop_exit
      _
    %2167 = vsyncpa [#allocation3], 1
    %s2168 = scalar_lea.sflag [#allocation3], 1
    %2169 = vsyncpa %s2168, 1
    %2170 = vsyncpa [#allocation4], 1
    %s2171 = scalar_lea.sflag [#allocation4], 1
    %2172 = vsyncpa %s2171, 1
    %2173 = vsyncpa [#allocation6], 1

</llo_original>
